<compile_context>
chip_gen: v6e
topology: v6e:2x2x1
jax: 0.10.0
libtpu: 0.0.40
codegen_flags: <defaults>
</compile_context>

<pallas_src>
import functools
import math

import jax
import jax.numpy as jnp
from jax.experimental import pallas as pl
from jax.experimental.pallas import tpu as pltpu


# --------------------------- Fused per-layer kernel --------------------------

def _bert_layer_kernel(emb_ref, mask_ref, embln_ref,
                       wqkv_ref, bqkv_ref, wo_ref, bo_ref, ln1_ref,
                       w1_ref, b1_ref, w2_ref, b2_ref, ln2_ref,
                       wc_ref, bc_ref,
                       o_ref,
                       x_ref,
                       *, bt, S, H, nH, D, I, L, eps, scale):
    f32 = jnp.float32
    bf16 = jnp.bfloat16
    l = pl.program_id(1)

    def layer_norm(x, gb):
        # gb: (2, H) -> row 0 = gamma, row 1 = beta
        mu = jnp.mean(x, axis=-1, keepdims=True)
        d = x - mu
        var = jnp.mean(d * d, axis=-1, keepdims=True)
        return d * jax.lax.rsqrt(var + eps) * gb[0:1, :] + gb[1:2, :]

    def erf(z):
        # Abramowitz & Stegun 7.1.26, |error| <= 1.5e-7 (exp/mul only; matches
        # the exact-erf GELU of HF BERT to ~1e-7).
        a1, a2, a3, a4, a5 = (0.254829592, -0.284496736, 1.421413741,
                              -1.453152027, 1.061405429)
        p = 0.3275911
        az = jnp.abs(z)
        t = 1.0 / (1.0 + p * az)
        poly = ((((a5 * t + a4) * t + a3) * t + a2) * t + a1) * t
        y = 1.0 - poly * jnp.exp(-az * az)
        return jnp.where(z >= 0.0, y, -y)

    inv_sqrt2 = 1.0 / math.sqrt(2.0)

    def gelu(z):
        return 0.5 * z * (1.0 + erf(z * inv_sqrt2))

    # ---- first layer step of this batch block: embedding LayerNorm ----
    @pl.when(l == 0)
    def _():
        emb = emb_ref[...].reshape(bt * S, H)
        x_ref[...] = layer_norm(emb, embln_ref[...])

    x = x_ref[...]                                        # (bt*S, H) f32

    # HF extended attention mask for this batch block: (bt, 1, S)
    add_mask = (1.0 - mask_ref[...]) * -10000.0

    wqkv = wqkv_ref[0]          # (H, 3H)  bf16
    bqkv = bqkv_ref[0]          # (1, 3H)  f32
    wo = wo_ref[0]              # (H, H)   bf16
    bo = bo_ref[0]              # (1, H)   f32
    ln1 = ln1_ref[0]            # (2, H)   f32
    w1 = w1_ref[0]              # (H, I)   bf16
    b1 = b1_ref[0]              # (1, I)   f32
    w2 = w2_ref[0]              # (I, H)   bf16
    b2 = b2_ref[0]              # (1, H)   f32
    ln2 = ln2_ref[0]            # (2, H)   f32

    # Fused QKV projection (bf16 operands on the MXU, f32 accumulate).
    qkv = jnp.dot(x.astype(bf16), wqkv, preferred_element_type=f32) + bqkv

    # Self-attention: batched over the batch dim with 3-D einsums, small static
    # loop over heads only.  Per-head contexts are values, concatenated once
    # along the lane axis (no masked D-wide VMEM stores, no ctx scratch).
    ctx_heads = []
    for h in range(nH):
        q = qkv[:, h * D:(h + 1) * D].reshape(bt, S, D).astype(bf16)
        k = qkv[:, H + h * D:H + (h + 1) * D].reshape(bt, S, D).astype(bf16)
        v = qkv[:, 2 * H + h * D:2 * H + (h + 1) * D].reshape(bt, S, D).astype(bf16)
        s = jnp.einsum('bqd,bkd->bqk', q, k,
                       preferred_element_type=f32) * scale           # (bt,S,S)
        s = s + add_mask
        s = s - jnp.max(s, axis=-1, keepdims=True)
        p = jnp.exp(s)
        p = p / jnp.sum(p, axis=-1, keepdims=True)                    # exact
        ctx = jnp.einsum('bqk,bkd->bqd', p.astype(bf16), v,
                         preferred_element_type=f32)                  # (bt,S,D)
        ctx_heads.append(ctx.reshape(bt * S, D))
    ctx = jnp.concatenate(ctx_heads, axis=-1)                         # (bt*S,H)

    attn = jnp.dot(ctx.astype(bf16), wo, preferred_element_type=f32) + bo
    x = layer_norm(attn + x, ln1)

    hdn = gelu(jnp.dot(x.astype(bf16), w1, preferred_element_type=f32) + b1)
    ffn = jnp.dot(hdn.astype(bf16), w2, preferred_element_type=f32) + b2
    x = layer_norm(ffn + x, ln2)

    x_ref[...] = x

    # ---- last layer step: CLS pooling -> classifier -> sigmoid ----
    @pl.when(l == L - 1)
    def _():
        cls = jnp.concatenate([x[i * S:i * S + 1, :] for i in range(bt)],
                              axis=0)                                 # (bt, H)
        # nn.Linear(H, 1): logits = cls @ W^T + b, W stored as (1, H) row.
        logits = jnp.sum(cls * wc_ref[...], axis=-1, keepdims=True) + bc_ref[...]
        probs = 1.0 / (1.0 + jnp.exp(-logits))
        o_ref[...] = probs.reshape(bt, 1, 1).astype(o_ref.dtype)


# -------------------------------- Model glue --------------------------------

def init_params(key, cfg):
    V, P, T = cfg["vocab"], cfg["max_pos"], cfg["type_vocab"]
    H, I, L = cfg["hidden"], cfg["intermediate"], cfg["layers"]
    std = 0.02
    ks = jax.random.split(key, 8)
    bf16 = jnp.bfloat16

    def nrm(k, shape, dtype=jnp.float32):
        return (jax.random.normal(k, shape, jnp.float32) * std).astype(dtype)

    def ln_stack(n):
        return jnp.concatenate([jnp.ones((n, 1, H), jnp.float32),
                                jnp.zeros((n, 1, H), jnp.float32)], axis=1)

    return dict(
        word_emb=nrm(ks[0], (V, H)),
        pos_emb=nrm(ks[1], (P, H)),
        type_emb=nrm(ks[2], (T, H)),
        emb_ln=ln_stack(1)[0],                       # (2, H)
        wqkv=nrm(ks[3], (L, H, 3 * H), bf16),        # fused Q|K|V, bf16 stream
        bqkv=jnp.zeros((L, 1, 3 * H), jnp.float32),
        wo=nrm(ks[4], (L, H, H), bf16),
        bo=jnp.zeros((L, 1, H), jnp.float32),
        ln1=ln_stack(L),                             # (L, 2, H)
        w1=nrm(ks[5], (L, H, I), bf16),
        b1=jnp.zeros((L, 1, I), jnp.float32),
        w2=nrm(ks[6], (L, I, H), bf16),
        b2=jnp.zeros((L, 1, H), jnp.float32),
        ln2=ln_stack(L),
        wc=nrm(ks[7], (1, H)),                       # classifier weight row
        bc=jnp.zeros((1, 1), jnp.float32),
    )


def make_forward(cfg, batch_block=1):
    """cfg is static Python config (closed over) -> no tracers in scalar math."""
    H, nH, I, L = cfg["hidden"], cfg["heads"], cfg["intermediate"], cfg["layers"]
    D = H // nH
    scale = 1.0 / math.sqrt(D)
    bt = batch_block

    def forward(params, input_ids, attention_mask):
        B, S = input_ids.shape
        assert B % bt == 0

        # Embedding gather stays in plain JAX (not a Pallas hot path).
        emb = (jnp.take(params["word_emb"], input_ids, axis=0)
               + params["pos_emb"][None, :S, :]
               + params["type_emb"][0][None, None, :])              # (B, S, H)
        mask = attention_mask.astype(jnp.float32).reshape(B, 1, S)

        kernel = functools.partial(_bert_layer_kernel, bt=bt, S=S, H=H, nH=nH,
                                   D=D, I=I, L=L, eps=1e-12, scale=scale)

        out = pl.pallas_call(
            kernel,
            out_shape=jax.ShapeDtypeStruct((B, 1, 1), jnp.float32),
            grid_spec=pltpu.PrefetchScalarGridSpec(
                num_scalar_prefetch=0,
                grid=(B // bt, L),
                in_specs=[
                    pl.BlockSpec((bt, S, H), lambda b, l: (b, 0, 0)),     # emb
                    pl.BlockSpec((bt, 1, S), lambda b, l: (b, 0, 0)),     # mask
                    pl.BlockSpec((2, H), lambda b, l: (0, 0)),            # emb LN
                    pl.BlockSpec((1, H, 3 * H), lambda b, l: (l, 0, 0)),  # wqkv
                    pl.BlockSpec((1, 1, 3 * H), lambda b, l: (l, 0, 0)),  # bqkv
                    pl.BlockSpec((1, H, H), lambda b, l: (l, 0, 0)),      # wo
                    pl.BlockSpec((1, 1, H), lambda b, l: (l, 0, 0)),      # bo
                    pl.BlockSpec((1, 2, H), lambda b, l: (l, 0, 0)),      # ln1
                    pl.BlockSpec((1, H, I), lambda b, l: (l, 0, 0)),      # w1
                    pl.BlockSpec((1, 1, I), lambda b, l: (l, 0, 0)),      # b1
                    pl.BlockSpec((1, I, H), lambda b, l: (l, 0, 0)),      # w2
                    pl.BlockSpec((1, 1, H), lambda b, l: (l, 0, 0)),      # b2
                    pl.BlockSpec((1, 2, H), lambda b, l: (l, 0, 0)),      # ln2
                    pl.BlockSpec((1, H), lambda b, l: (0, 0)),            # wc
                    pl.BlockSpec((1, 1), lambda b, l: (0, 0)),            # bc
                ],
                out_specs=pl.BlockSpec((bt, 1, 1), lambda b, l: (b, 0, 0)),
                scratch_shapes=[pltpu.VMEM((bt * S, H), jnp.float32)],    # x
            ),
            compiler_params=pltpu.CompilerParams(
                dimension_semantics=("parallel", "arbitrary"),
                # v7x-aware budget (64 MiB physical VMEM per TC).
                vmem_limit_bytes=48 * 1024 * 1024),
        )(emb, mask, params["emb_ln"],
          params["wqkv"], params["bqkv"], params["wo"], params["bo"],
          params["ln1"], params["w1"], params["b1"], params["w2"],
          params["b2"], params["ln2"], params["wc"], params["bc"])
        return out.reshape(B, 1)

    return forward


# ----------------------------------- Main -----------------------------------

if __name__ == "__main__":
    # TODO(synk): pretrained bert-base-uncased weight/tokenizer loading has no
    # in-script equivalent; a scaled-down, deterministically-initialized clone
    # (all token_type_ids == 0) is used instead.
    cfg = dict(vocab=100, max_pos=16, type_vocab=2,
               hidden=32, heads=2, intermediate=64, layers=2)

    key = jax.random.PRNGKey(0)
    k_params, k_ids = jax.random.split(key)
    params = init_params(k_params, cfg)

    B, S = 2, 8
    input_ids = jax.random.randint(k_ids, (B, S), 0, cfg["vocab"],
                                   dtype=jnp.int32)
    attention_mask = jnp.array(
        [[1, 1, 1, 1, 1, 1, 1, 1],
         [1, 1, 1, 1, 1, 0, 0, 0]], dtype=jnp.int32)

    forward = jax.jit(make_forward(cfg, batch_block=1))
    probs = jax.block_until_ready(forward(params, input_ids, attention_mask))

    assert probs.shape == (B, 1)
    assert bool(jnp.all(jnp.isfinite(probs)))
    assert bool(jnp.all((probs >= 0.0) & (probs <= 1.0)))
    print("KERNEL_OK")
</pallas_src>

<mosaic_0001>
module attributes {stable_mosaic.version = 11 : i64} {
  func.func @_bert_layer_kernel(%arg0: i32, %arg1: i32, %arg2: memref<1x8x32xf32, #tpu.memory_space<vmem>>, %arg3: memref<1x1x8xf32, #tpu.memory_space<vmem>>, %arg4: memref<2x32xf32, #tpu.memory_space<vmem>>, %arg5: memref<1x32x96xbf16, #tpu.memory_space<vmem>>, %arg6: memref<1x1x96xf32, #tpu.memory_space<vmem>>, %arg7: memref<1x32x32xbf16, #tpu.memory_space<vmem>>, %arg8: memref<1x1x32xf32, #tpu.memory_space<vmem>>, %arg9: memref<1x2x32xf32, #tpu.memory_space<vmem>>, %arg10: memref<1x32x64xbf16, #tpu.memory_space<vmem>>, %arg11: memref<1x1x64xf32, #tpu.memory_space<vmem>>, %arg12: memref<1x64x32xbf16, #tpu.memory_space<vmem>>, %arg13: memref<1x1x32xf32, #tpu.memory_space<vmem>>, %arg14: memref<1x2x32xf32, #tpu.memory_space<vmem>>, %arg15: memref<1x32xf32, #tpu.memory_space<vmem>>, %arg16: memref<1x1xf32, #tpu.memory_space<vmem>>, %arg17: memref<1x1x1xf32, #tpu.memory_space<vmem>>, %arg18: memref<8x32xf32, #tpu.memory_space<vmem>>) attributes {dimension_semantics = [#tpu.dimension_semantics<parallel>, #tpu.dimension_semantics<arbitrary>], iteration_bounds = array<i64: 2, 2>, scalar_prefetch = 0 : i64, scratch_operands = 1 : i64, tpu.core_type = #tpu.core_type<tc>, window_params = [{transform_indices = @transform_0, window_bounds = array<i64: 1, 8, 32>}, {transform_indices = @transform_1, window_bounds = array<i64: 1, 1, 8>}, {pipeline_mode = #tpu.pipeline_mode<synchronous>, transform_indices = @transform_2, window_bounds = array<i64: 2, 32>}, {transform_indices = @transform_3, window_bounds = array<i64: 1, 32, 96>}, {transform_indices = @transform_4, window_bounds = array<i64: 1, 1, 96>}, {transform_indices = @transform_5, window_bounds = array<i64: 1, 32, 32>}, {transform_indices = @transform_6, window_bounds = array<i64: 1, 1, 32>}, {transform_indices = @transform_7, window_bounds = array<i64: 1, 2, 32>}, {transform_indices = @transform_8, window_bounds = array<i64: 1, 32, 64>}, {transform_indices = @transform_9, window_bounds = array<i64: 1, 1, 64>}, {transform_indices = @transform_10, window_bounds = array<i64: 1, 64, 32>}, {transform_indices = @transform_11, window_bounds = array<i64: 1, 1, 32>}, {transform_indices = @transform_12, window_bounds = array<i64: 1, 2, 32>}, {pipeline_mode = #tpu.pipeline_mode<synchronous>, transform_indices = @transform_13, window_bounds = array<i64: 1, 32>}, {pipeline_mode = #tpu.pipeline_mode<synchronous>, transform_indices = @transform_14, window_bounds = array<i64: 1, 1>}, {transform_indices = @transform_15, window_bounds = array<i64: 1, 1, 1>}]} {
    %c0_i32 = arith.constant 0 : i32
    %0 = arith.cmpi eq, %arg1, %c0_i32 : i32
    %1 = arith.extui %0 : i1 to i32
    %c0_i32_0 = arith.constant 0 : i32
    %2 = arith.cmpi ne, %1, %c0_i32_0 : i32
    scf.if %2 {
      %c0_78 = arith.constant 0 : index
      %c0_79 = arith.constant 0 : index
      %c0_80 = arith.constant 0 : index
      %188 = vector.load %arg2[%c0_78, %c0_79, %c0_80] : memref<1x8x32xf32, #tpu.memory_space<vmem>>, vector<1x8x32xf32>
      %189 = vector.shape_cast %188 : vector<1x8x32xf32> to vector<8x32xf32>
      %c0_81 = arith.constant 0 : index
      %c0_82 = arith.constant 0 : index
      %190 = vector.load %arg4[%c0_81, %c0_82] : memref<2x32xf32, #tpu.memory_space<vmem>>, vector<2x32xf32>
      %cst_83 = arith.constant dense<0.000000e+00> : vector<8xf32>
      %191 = vector.multi_reduction <add>, %189, %cst_83 [1] : vector<8x32xf32> to vector<8xf32>
      %192 = vector.shape_cast %191 : vector<8xf32> to vector<8x1xf32>
      %cst_84 = arith.constant 3.200000e+01 : f32
      %193 = vector.broadcast %cst_84 : f32 to vector<8x1xf32>
      %194 = arith.divf %192, %193 : vector<8x1xf32>
      %195 = vector.broadcast %194 : vector<8x1xf32> to vector<8x32xf32>
      %196 = arith.subf %189, %195 : vector<8x32xf32>
      %197 = arith.mulf %196, %196 : vector<8x32xf32>
      %cst_85 = arith.constant dense<0.000000e+00> : vector<8xf32>
      %198 = vector.multi_reduction <add>, %197, %cst_85 [1] : vector<8x32xf32> to vector<8xf32>
      %199 = vector.shape_cast %198 : vector<8xf32> to vector<8x1xf32>
      %cst_86 = arith.constant 3.200000e+01 : f32
      %200 = vector.broadcast %cst_86 : f32 to vector<8x1xf32>
      %201 = arith.divf %199, %200 : vector<8x1xf32>
      %cst_87 = arith.constant 9.99999996E-13 : f32
      %202 = vector.broadcast %cst_87 : f32 to vector<8x1xf32>
      %203 = arith.addf %201, %202 : vector<8x1xf32>
      %204 = math.rsqrt %203 : vector<8x1xf32>
      %205 = vector.broadcast %204 : vector<8x1xf32> to vector<8x32xf32>
      %206 = arith.mulf %196, %205 : vector<8x32xf32>
      %207 = vector.extract_strided_slice %190 {offsets = [0, 0], sizes = [1, 32], strides = [1, 1]} : vector<2x32xf32> to vector<1x32xf32>
      %208 = vector.broadcast %207 : vector<1x32xf32> to vector<8x32xf32>
      %209 = arith.mulf %206, %208 : vector<8x32xf32>
      %210 = vector.extract_strided_slice %190 {offsets = [1, 0], sizes = [1, 32], strides = [1, 1]} : vector<2x32xf32> to vector<1x32xf32>
      %211 = vector.broadcast %210 : vector<1x32xf32> to vector<8x32xf32>
      %212 = arith.addf %209, %211 : vector<8x32xf32>
      %c0_88 = arith.constant 0 : index
      %c0_89 = arith.constant 0 : index
      %213 = vector.load %arg18[%c0_88, %c0_89] : memref<8x32xf32, #tpu.memory_space<vmem>>, vector<8x32xf32>
      tpu.vector_store %arg18[%c0_88, %c0_89], %212 {strides = array<i32>} : memref<8x32xf32, #tpu.memory_space<vmem>>, vector<8x32xf32>,
    } else {
    }
    %c0 = arith.constant 0 : index
    %c0_1 = arith.constant 0 : index
    %3 = vector.load %arg18[%c0, %c0_1] : memref<8x32xf32, #tpu.memory_space<vmem>>, vector<8x32xf32>
    %c0_2 = arith.constant 0 : index
    %c0_3 = arith.constant 0 : index
    %c0_4 = arith.constant 0 : index
    %4 = vector.load %arg3[%c0_2, %c0_3, %c0_4] : memref<1x1x8xf32, #tpu.memory_space<vmem>>, vector<1x1x8xf32>
    %cst = arith.constant 1.000000e+00 : f32
    %5 = vector.broadcast %cst : f32 to vector<1x1x8xf32>
    %6 = arith.subf %5, %4 : vector<1x1x8xf32>
    %cst_5 = arith.constant -1.000000e+04 : f32
    %7 = vector.broadcast %cst_5 : f32 to vector<1x1x8xf32>
    %8 = arith.mulf %6, %7 : vector<1x1x8xf32>
    %c0_6 = arith.constant 0 : index
    %c0_7 = arith.constant 0 : index
    %c0_8 = arith.constant 0 : index
    %9 = vector.load %arg5[%c0_6, %c0_7, %c0_8] : memref<1x32x96xbf16, #tpu.memory_space<vmem>>, vector<1x32x96xbf16>
    %10 = vector.shape_cast %9 : vector<1x32x96xbf16> to vector<32x96xbf16>
    %c0_9 = arith.constant 0 : index
    %c0_10 = arith.constant 0 : index
    %c0_11 = arith.constant 0 : index
    %11 = vector.load %arg6[%c0_9, %c0_10, %c0_11] : memref<1x1x96xf32, #tpu.memory_space<vmem>>, vector<1x1x96xf32>
    %12 = vector.shape_cast %11 : vector<1x1x96xf32> to vector<1x96xf32>
    %c0_12 = arith.constant 0 : index
    %c0_13 = arith.constant 0 : index
    %c0_14 = arith.constant 0 : index
    %13 = vector.load %arg7[%c0_12, %c0_13, %c0_14] : memref<1x32x32xbf16, #tpu.memory_space<vmem>>, vector<1x32x32xbf16>
    %14 = vector.shape_cast %13 : vector<1x32x32xbf16> to vector<32x32xbf16>
    %c0_15 = arith.constant 0 : index
    %c0_16 = arith.constant 0 : index
    %c0_17 = arith.constant 0 : index
    %15 = vector.load %arg8[%c0_15, %c0_16, %c0_17] : memref<1x1x32xf32, #tpu.memory_space<vmem>>, vector<1x1x32xf32>
    %16 = vector.shape_cast %15 : vector<1x1x32xf32> to vector<1x32xf32>
    %c0_18 = arith.constant 0 : index
    %c0_19 = arith.constant 0 : index
    %c0_20 = arith.constant 0 : index
    %17 = vector.load %arg9[%c0_18, %c0_19, %c0_20] : memref<1x2x32xf32, #tpu.memory_space<vmem>>, vector<1x2x32xf32>
    %18 = vector.shape_cast %17 : vector<1x2x32xf32> to vector<2x32xf32>
    %c0_21 = arith.constant 0 : index
    %c0_22 = arith.constant 0 : index
    %c0_23 = arith.constant 0 : index
    %19 = vector.load %arg10[%c0_21, %c0_22, %c0_23] : memref<1x32x64xbf16, #tpu.memory_space<vmem>>, vector<1x32x64xbf16>
    %20 = vector.shape_cast %19 : vector<1x32x64xbf16> to vector<32x64xbf16>
    %c0_24 = arith.constant 0 : index
    %c0_25 = arith.constant 0 : index
    %c0_26 = arith.constant 0 : index
    %21 = vector.load %arg11[%c0_24, %c0_25, %c0_26] : memref<1x1x64xf32, #tpu.memory_space<vmem>>, vector<1x1x64xf32>
    %22 = vector.shape_cast %21 : vector<1x1x64xf32> to vector<1x64xf32>
    %c0_27 = arith.constant 0 : index
    %c0_28 = arith.constant 0 : index
    %c0_29 = arith.constant 0 : index
    %23 = vector.load %arg12[%c0_27, %c0_28, %c0_29] : memref<1x64x32xbf16, #tpu.memory_space<vmem>>, vector<1x64x32xbf16>
    %24 = vector.shape_cast %23 : vector<1x64x32xbf16> to vector<64x32xbf16>
    %c0_30 = arith.constant 0 : index
    %c0_31 = arith.constant 0 : index
    %c0_32 = arith.constant 0 : index
    %25 = vector.load %arg13[%c0_30, %c0_31, %c0_32] : memref<1x1x32xf32, #tpu.memory_space<vmem>>, vector<1x1x32xf32>
    %26 = vector.shape_cast %25 : vector<1x1x32xf32> to vector<1x32xf32>
    %c0_33 = arith.constant 0 : index
    %c0_34 = arith.constant 0 : index
    %c0_35 = arith.constant 0 : index
    %27 = vector.load %arg14[%c0_33, %c0_34, %c0_35] : memref<1x2x32xf32, #tpu.memory_space<vmem>>, vector<1x2x32xf32>
    %28 = vector.shape_cast %27 : vector<1x2x32xf32> to vector<2x32xf32>
    %29 = arith.truncf %3 : vector<8x32xf32> to vector<8x32xbf16>
    %cst_36 = arith.constant dense<0.000000e+00> : vector<8x96xf32>
    %30 = tpu.matmul %29, %10, %cst_36 {dimension_numbers = #tpu.dot_dimension_numbers<[1], [0], [0], [1], [0, 0, 1, 1], [], []>} : vector<8x32xbf16>, vector<32x96xbf16>, vector<8x96xf32> -> vector<8x96xf32>
    %31 = vector.broadcast %12 : vector<1x96xf32> to vector<8x96xf32>
    %32 = arith.addf %30, %31 : vector<8x96xf32>
    %33 = vector.extract_strided_slice %32 {offsets = [0, 0], sizes = [8, 16], strides = [1, 1]} : vector<8x96xf32> to vector<8x16xf32>
    %34 = vector.shape_cast %33 : vector<8x16xf32> to vector<1x8x16xf32>
    %35 = arith.truncf %34 : vector<1x8x16xf32> to vector<1x8x16xbf16>
    %36 = vector.extract_strided_slice %32 {offsets = [0, 32], sizes = [8, 16], strides = [1, 1]} : vector<8x96xf32> to vector<8x16xf32>
    %37 = vector.shape_cast %36 : vector<8x16xf32> to vector<1x8x16xf32>
    %38 = arith.truncf %37 : vector<1x8x16xf32> to vector<1x8x16xbf16>
    %39 = vector.extract_strided_slice %32 {offsets = [0, 64], sizes = [8, 16], strides = [1, 1]} : vector<8x96xf32> to vector<8x16xf32>
    %40 = vector.shape_cast %39 : vector<8x16xf32> to vector<1x8x16xf32>
    %41 = arith.truncf %40 : vector<1x8x16xf32> to vector<1x8x16xbf16>
    "tpu.trace_start"() <{level = 10 : i32, message = "bqd,bkd->bqk"}> : () -> ()
    %cst_37 = arith.constant dense<0.000000e+00> : vector<1x8x8xf32>
    %42 = tpu.matmul %35, %38, %cst_37 {dimension_numbers = #tpu.dot_dimension_numbers<[2], [2], [1], [1], [0, 0, 0, 1, 1, 1], [0], [0]>} : vector<1x8x16xbf16>, vector<1x8x16xbf16>, vector<1x8x8xf32> -> vector<1x8x8xf32>
    "tpu.trace_stop"() : () -> ()
    %cst_38 = arith.constant 2.500000e-01 : f32
    %43 = vector.broadcast %cst_38 : f32 to vector<1x8x8xf32>
    %44 = arith.mulf %42, %43 : vector<1x8x8xf32>
    %45 = vector.broadcast %8 : vector<1x1x8xf32> to vector<1x8x8xf32>
    %46 = arith.addf %44, %45 : vector<1x8x8xf32>
    %cst_39 = arith.constant dense<0xFF800000> : vector<1x8xf32>
    %47 = vector.multi_reduction <maximumf>, %46, %cst_39 [2] : vector<1x8x8xf32> to vector<1x8xf32>
    %48 = vector.shape_cast %47 : vector<1x8xf32> to vector<1x8x1xf32>
    %49 = vector.broadcast %48 : vector<1x8x1xf32> to vector<1x8x8xf32>
    %50 = arith.subf %46, %49 : vector<1x8x8xf32>
    %51 = math.exp %50 : vector<1x8x8xf32>
    %cst_40 = arith.constant dense<0.000000e+00> : vector<1x8xf32>
    %52 = vector.multi_reduction <add>, %51, %cst_40 [2] : vector<1x8x8xf32> to vector<1x8xf32>
    %53 = vector.shape_cast %52 : vector<1x8xf32> to vector<1x8x1xf32>
    %54 = vector.broadcast %53 : vector<1x8x1xf32> to vector<1x8x8xf32>
    %55 = arith.divf %51, %54 : vector<1x8x8xf32>
    %56 = arith.truncf %55 : vector<1x8x8xf32> to vector<1x8x8xbf16>
    "tpu.trace_start"() <{level = 10 : i32, message = "bqk,bkd->bqd"}> : () -> ()
    %cst_41 = arith.constant dense<0.000000e+00> : vector<1x8x16xf32>
    %57 = tpu.matmul %56, %41, %cst_41 {dimension_numbers = #tpu.dot_dimension_numbers<[2], [1], [1], [2], [0, 0, 0, 1, 1, 2], [0], [0]>} : vector<1x8x8xbf16>, vector<1x8x16xbf16>, vector<1x8x16xf32> -> vector<1x8x16xf32>
    "tpu.trace_stop"() : () -> ()
    %58 = vector.shape_cast %57 : vector<1x8x16xf32> to vector<8x16xf32>
    %59 = vector.extract_strided_slice %32 {offsets = [0, 16], sizes = [8, 16], strides = [1, 1]} : vector<8x96xf32> to vector<8x16xf32>
    %60 = vector.shape_cast %59 : vector<8x16xf32> to vector<1x8x16xf32>
    %61 = arith.truncf %60 : vector<1x8x16xf32> to vector<1x8x16xbf16>
    %62 = vector.extract_strided_slice %32 {offsets = [0, 48], sizes = [8, 16], strides = [1, 1]} : vector<8x96xf32> to vector<8x16xf32>
    %63 = vector.shape_cast %62 : vector<8x16xf32> to vector<1x8x16xf32>
    %64 = arith.truncf %63 : vector<1x8x16xf32> to vector<1x8x16xbf16>
    %65 = vector.extract_strided_slice %32 {offsets = [0, 80], sizes = [8, 16], strides = [1, 1]} : vector<8x96xf32> to vector<8x16xf32>
    %66 = vector.shape_cast %65 : vector<8x16xf32> to vector<1x8x16xf32>
    %67 = arith.truncf %66 : vector<1x8x16xf32> to vector<1x8x16xbf16>
    "tpu.trace_start"() <{level = 10 : i32, message = "bqd,bkd->bqk"}> : () -> ()
    %cst_42 = arith.constant dense<0.000000e+00> : vector<1x8x8xf32>
    %68 = tpu.matmul %61, %64, %cst_42 {dimension_numbers = #tpu.dot_dimension_numbers<[2], [2], [1], [1], [0, 0, 0, 1, 1, 1], [0], [0]>} : vector<1x8x16xbf16>, vector<1x8x16xbf16>, vector<1x8x8xf32> -> vector<1x8x8xf32>
    "tpu.trace_stop"() : () -> ()
    %cst_43 = arith.constant 2.500000e-01 : f32
    %69 = vector.broadcast %cst_43 : f32 to vector<1x8x8xf32>
    %70 = arith.mulf %68, %69 : vector<1x8x8xf32>
    %71 = vector.broadcast %8 : vector<1x1x8xf32> to vector<1x8x8xf32>
    %72 = arith.addf %70, %71 : vector<1x8x8xf32>
    %cst_44 = arith.constant dense<0xFF800000> : vector<1x8xf32>
    %73 = vector.multi_reduction <maximumf>, %72, %cst_44 [2] : vector<1x8x8xf32> to vector<1x8xf32>
    %74 = vector.shape_cast %73 : vector<1x8xf32> to vector<1x8x1xf32>
    %75 = vector.broadcast %74 : vector<1x8x1xf32> to vector<1x8x8xf32>
    %76 = arith.subf %72, %75 : vector<1x8x8xf32>
    %77 = math.exp %76 : vector<1x8x8xf32>
    %cst_45 = arith.constant dense<0.000000e+00> : vector<1x8xf32>
    %78 = vector.multi_reduction <add>, %77, %cst_45 [2] : vector<1x8x8xf32> to vector<1x8xf32>
    %79 = vector.shape_cast %78 : vector<1x8xf32> to vector<1x8x1xf32>
    %80 = vector.broadcast %79 : vector<1x8x1xf32> to vector<1x8x8xf32>
    %81 = arith.divf %77, %80 : vector<1x8x8xf32>
    %82 = arith.truncf %81 : vector<1x8x8xf32> to vector<1x8x8xbf16>
    "tpu.trace_start"() <{level = 10 : i32, message = "bqk,bkd->bqd"}> : () -> ()
    %cst_46 = arith.constant dense<0.000000e+00> : vector<1x8x16xf32>
    %83 = tpu.matmul %82, %67, %cst_46 {dimension_numbers = #tpu.dot_dimension_numbers<[2], [1], [1], [2], [0, 0, 0, 1, 1, 2], [0], [0]>} : vector<1x8x8xbf16>, vector<1x8x16xbf16>, vector<1x8x16xf32> -> vector<1x8x16xf32>
    "tpu.trace_stop"() : () -> ()
    %84 = vector.shape_cast %83 : vector<1x8x16xf32> to vector<8x16xf32>
    %85 = tpu.concatenate %58, %84 in 1 : vector<8x16xf32>, vector<8x16xf32> -> vector<8x32xf32>
    %86 = arith.truncf %85 : vector<8x32xf32> to vector<8x32xbf16>
    %cst_47 = arith.constant dense<0.000000e+00> : vector<8x32xf32>
    %87 = tpu.matmul %86, %14, %cst_47 {dimension_numbers = #tpu.dot_dimension_numbers<[1], [0], [0], [1], [0, 0, 1, 1], [], []>} : vector<8x32xbf16>, vector<32x32xbf16>, vector<8x32xf32> -> vector<8x32xf32>
    %88 = vector.broadcast %16 : vector<1x32xf32> to vector<8x32xf32>
    %89 = arith.addf %87, %88 : vector<8x32xf32>
    %90 = arith.addf %89, %3 : vector<8x32xf32>
    %cst_48 = arith.constant dense<0.000000e+00> : vector<8xf32>
    %91 = vector.multi_reduction <add>, %90, %cst_48 [1] : vector<8x32xf32> to vector<8xf32>
    %92 = vector.shape_cast %91 : vector<8xf32> to vector<8x1xf32>
    %cst_49 = arith.constant 3.200000e+01 : f32
    %93 = vector.broadcast %cst_49 : f32 to vector<8x1xf32>
    %94 = arith.divf %92, %93 : vector<8x1xf32>
    %95 = vector.broadcast %94 : vector<8x1xf32> to vector<8x32xf32>
    %96 = arith.subf %90, %95 : vector<8x32xf32>
    %97 = arith.mulf %96, %96 : vector<8x32xf32>
    %cst_50 = arith.constant dense<0.000000e+00> : vector<8xf32>
    %98 = vector.multi_reduction <add>, %97, %cst_50 [1] : vector<8x32xf32> to vector<8xf32>
    %99 = vector.shape_cast %98 : vector<8xf32> to vector<8x1xf32>
    %cst_51 = arith.constant 3.200000e+01 : f32
    %100 = vector.broadcast %cst_51 : f32 to vector<8x1xf32>
    %101 = arith.divf %99, %100 : vector<8x1xf32>
    %cst_52 = arith.constant 9.99999996E-13 : f32
    %102 = vector.broadcast %cst_52 : f32 to vector<8x1xf32>
    %103 = arith.addf %101, %102 : vector<8x1xf32>
    %104 = math.rsqrt %103 : vector<8x1xf32>
    %105 = vector.broadcast %104 : vector<8x1xf32> to vector<8x32xf32>
    %106 = arith.mulf %96, %105 : vector<8x32xf32>
    %107 = vector.extract_strided_slice %18 {offsets = [0, 0], sizes = [1, 32], strides = [1, 1]} : vector<2x32xf32> to vector<1x32xf32>
    %108 = vector.broadcast %107 : vector<1x32xf32> to vector<8x32xf32>
    %109 = arith.mulf %106, %108 : vector<8x32xf32>
    %110 = vector.extract_strided_slice %18 {offsets = [1, 0], sizes = [1, 32], strides = [1, 1]} : vector<2x32xf32> to vector<1x32xf32>
    %111 = vector.broadcast %110 : vector<1x32xf32> to vector<8x32xf32>
    %112 = arith.addf %109, %111 : vector<8x32xf32>
    %113 = arith.truncf %112 : vector<8x32xf32> to vector<8x32xbf16>
    %cst_53 = arith.constant dense<0.000000e+00> : vector<8x64xf32>
    %114 = tpu.matmul %113, %20, %cst_53 {dimension_numbers = #tpu.dot_dimension_numbers<[1], [0], [0], [1], [0, 0, 1, 1], [], []>} : vector<8x32xbf16>, vector<32x64xbf16>, vector<8x64xf32> -> vector<8x64xf32>
    %115 = vector.broadcast %22 : vector<1x64xf32> to vector<8x64xf32>
    %116 = arith.addf %114, %115 : vector<8x64xf32>
    %cst_54 = arith.constant 5.000000e-01 : f32
    %117 = vector.broadcast %cst_54 : f32 to vector<8x64xf32>
    %118 = arith.mulf %117, %116 : vector<8x64xf32>
    %cst_55 = arith.constant 0.707106769 : f32
    %119 = vector.broadcast %cst_55 : f32 to vector<8x64xf32>
    %120 = arith.mulf %116, %119 : vector<8x64xf32>
    %121 = math.absf %120 : vector<8x64xf32>
    %cst_56 = arith.constant 0.327591091 : f32
    %122 = vector.broadcast %cst_56 : f32 to vector<8x64xf32>
    %123 = arith.mulf %122, %121 : vector<8x64xf32>
    %cst_57 = arith.constant 1.000000e+00 : f32
    %124 = vector.broadcast %cst_57 : f32 to vector<8x64xf32>
    %125 = arith.addf %124, %123 : vector<8x64xf32>
    %cst_58 = arith.constant 1.000000e+00 : f32
    %126 = vector.broadcast %cst_58 : f32 to vector<8x64xf32>
    %127 = arith.divf %126, %125 : vector<8x64xf32>
    %cst_59 = arith.constant 1.06140542 : f32
    %128 = vector.broadcast %cst_59 : f32 to vector<8x64xf32>
    %129 = arith.mulf %128, %127 : vector<8x64xf32>
    %cst_60 = arith.constant -1.45315206 : f32
    %130 = vector.broadcast %cst_60 : f32 to vector<8x64xf32>
    %131 = arith.addf %129, %130 : vector<8x64xf32>
    %132 = arith.mulf %131, %127 : vector<8x64xf32>
    %cst_61 = arith.constant 1.42141378 : f32
    %133 = vector.broadcast %cst_61 : f32 to vector<8x64xf32>
    %134 = arith.addf %132, %133 : vector<8x64xf32>
    %135 = arith.mulf %134, %127 : vector<8x64xf32>
    %cst_62 = arith.constant -0.284496725 : f32
    %136 = vector.broadcast %cst_62 : f32 to vector<8x64xf32>
    %137 = arith.addf %135, %136 : vector<8x64xf32>
    %138 = arith.mulf %137, %127 : vector<8x64xf32>
    %cst_63 = arith.constant 0.254829586 : f32
    %139 = vector.broadcast %cst_63 : f32 to vector<8x64xf32>
    %140 = arith.addf %138, %139 : vector<8x64xf32>
    %141 = arith.mulf %140, %127 : vector<8x64xf32>
    %cst_64 = arith.constant 0.000000e+00 : f32
    %142 = vector.broadcast %cst_64 : f32 to vector<8x64xf32>
    %143 = arith.subf %142, %121 : vector<8x64xf32>
    %144 = arith.mulf %143, %121 : vector<8x64xf32>
    %145 = math.exp %144 : vector<8x64xf32>
    %146 = arith.mulf %141, %145 : vector<8x64xf32>
    %cst_65 = arith.constant 1.000000e+00 : f32
    %147 = vector.broadcast %cst_65 : f32 to vector<8x64xf32>
    %148 = arith.subf %147, %146 : vector<8x64xf32>
    %cst_66 = arith.constant 0.000000e+00 : f32
    %149 = vector.broadcast %cst_66 : f32 to vector<8x64xf32>
    %150 = arith.cmpf oge, %120, %149 : vector<8x64xf32>
    %cst_67 = arith.constant 0.000000e+00 : f32
    %151 = vector.broadcast %cst_67 : f32 to vector<8x64xf32>
    %152 = arith.subf %151, %148 : vector<8x64xf32>
    %153 = arith.select %150, %148, %152 : vector<8x64xi1>, vector<8x64xf32>
    %cst_68 = arith.constant 1.000000e+00 : f32
    %154 = vector.broadcast %cst_68 : f32 to vector<8x64xf32>
    %155 = arith.addf %154, %153 : vector<8x64xf32>
    %156 = arith.mulf %118, %155 : vector<8x64xf32>
    %157 = arith.truncf %156 : vector<8x64xf32> to vector<8x64xbf16>
    %cst_69 = arith.constant dense<0.000000e+00> : vector<8x32xf32>
    %158 = tpu.matmul %157, %24, %cst_69 {dimension_numbers = #tpu.dot_dimension_numbers<[1], [0], [0], [1], [0, 0, 1, 1], [], []>} : vector<8x64xbf16>, vector<64x32xbf16>, vector<8x32xf32> -> vector<8x32xf32>
    %159 = vector.broadcast %26 : vector<1x32xf32> to vector<8x32xf32>
    %160 = arith.addf %158, %159 : vector<8x32xf32>
    %161 = arith.addf %160, %112 : vector<8x32xf32>
    %cst_70 = arith.constant dense<0.000000e+00> : vector<8xf32>
    %162 = vector.multi_reduction <add>, %161, %cst_70 [1] : vector<8x32xf32> to vector<8xf32>
    %163 = vector.shape_cast %162 : vector<8xf32> to vector<8x1xf32>
    %cst_71 = arith.constant 3.200000e+01 : f32
    %164 = vector.broadcast %cst_71 : f32 to vector<8x1xf32>
    %165 = arith.divf %163, %164 : vector<8x1xf32>
    %166 = vector.broadcast %165 : vector<8x1xf32> to vector<8x32xf32>
    %167 = arith.subf %161, %166 : vector<8x32xf32>
    %168 = arith.mulf %167, %167 : vector<8x32xf32>
    %cst_72 = arith.constant dense<0.000000e+00> : vector<8xf32>
    %169 = vector.multi_reduction <add>, %168, %cst_72 [1] : vector<8x32xf32> to vector<8xf32>
    %170 = vector.shape_cast %169 : vector<8xf32> to vector<8x1xf32>
    %cst_73 = arith.constant 3.200000e+01 : f32
    %171 = vector.broadcast %cst_73 : f32 to vector<8x1xf32>
    %172 = arith.divf %170, %171 : vector<8x1xf32>
    %cst_74 = arith.constant 9.99999996E-13 : f32
    %173 = vector.broadcast %cst_74 : f32 to vector<8x1xf32>
    %174 = arith.addf %172, %173 : vector<8x1xf32>
    %175 = math.rsqrt %174 : vector<8x1xf32>
    %176 = vector.broadcast %175 : vector<8x1xf32> to vector<8x32xf32>
    %177 = arith.mulf %167, %176 : vector<8x32xf32>
    %178 = vector.extract_strided_slice %28 {offsets = [0, 0], sizes = [1, 32], strides = [1, 1]} : vector<2x32xf32> to vector<1x32xf32>
    %179 = vector.broadcast %178 : vector<1x32xf32> to vector<8x32xf32>
    %180 = arith.mulf %177, %179 : vector<8x32xf32>
    %181 = vector.extract_strided_slice %28 {offsets = [1, 0], sizes = [1, 32], strides = [1, 1]} : vector<2x32xf32> to vector<1x32xf32>
    %182 = vector.broadcast %181 : vector<1x32xf32> to vector<8x32xf32>
    %183 = arith.addf %180, %182 : vector<8x32xf32>
    %c0_75 = arith.constant 0 : index
    %c0_76 = arith.constant 0 : index
    %184 = vector.load %arg18[%c0_75, %c0_76] : memref<8x32xf32, #tpu.memory_space<vmem>>, vector<8x32xf32>
    tpu.vector_store %arg18[%c0_75, %c0_76], %183 {strides = array<i32>} : memref<8x32xf32, #tpu.memory_space<vmem>>, vector<8x32xf32>,
    %c1_i32 = arith.constant 1 : i32
    %185 = arith.cmpi eq, %arg1, %c1_i32 : i32
    %186 = arith.extui %185 : i1 to i32
    %c0_i32_77 = arith.constant 0 : i32
    %187 = arith.cmpi ne, %186, %c0_i32_77 : i32
    scf.if %187 {
      %188 = vector.extract_strided_slice %183 {offsets = [0, 0], sizes = [1, 32], strides = [1, 1]} : vector<8x32xf32> to vector<1x32xf32>
      %c0_78 = arith.constant 0 : index
      %c0_79 = arith.constant 0 : index
      %189 = vector.load %arg15[%c0_78, %c0_79] : memref<1x32xf32, #tpu.memory_space<vmem>>, vector<1x32xf32>
      %190 = arith.mulf %188, %189 : vector<1x32xf32>
      %cst_80 = arith.constant dense<0.000000e+00> : vector<1xf32>
      %191 = vector.multi_reduction <add>, %190, %cst_80 [1] : vector<1x32xf32> to vector<1xf32>
      %192 = vector.shape_cast %191 : vector<1xf32> to vector<1x1xf32>
      %c0_81 = arith.constant 0 : index
      %c0_82 = arith.constant 0 : index
      %193 = vector.load %arg16[%c0_81, %c0_82] : memref<1x1xf32, #tpu.memory_space<vmem>>, vector<1x1xf32>
      %194 = arith.addf %192, %193 : vector<1x1xf32>
      %cst_83 = arith.constant 0.000000e+00 : f32
      %195 = vector.broadcast %cst_83 : f32 to vector<1x1xf32>
      %196 = arith.subf %195, %194 : vector<1x1xf32>
      %197 = math.exp %196 : vector<1x1xf32>
      %cst_84 = arith.constant 1.000000e+00 : f32
      %198 = vector.broadcast %cst_84 : f32 to vector<1x1xf32>
      %199 = arith.addf %198, %197 : vector<1x1xf32>
      %cst_85 = arith.constant 1.000000e+00 : f32
      %200 = vector.broadcast %cst_85 : f32 to vector<1x1xf32>
      %201 = arith.divf %200, %199 : vector<1x1xf32>
      %202 = vector.shape_cast %201 : vector<1x1xf32> to vector<1x1x1xf32>
      %c0_86 = arith.constant 0 : index
      %c0_87 = arith.constant 0 : index
      %c0_88 = arith.constant 0 : index
      %203 = vector.load %arg17[%c0_86, %c0_87, %c0_88] : memref<1x1x1xf32, #tpu.memory_space<vmem>>, vector<1x1x1xf32>
      tpu.vector_store %arg17[%c0_86, %c0_87, %c0_88], %202 {strides = array<i32>} : memref<1x1x1xf32, #tpu.memory_space<vmem>>, vector<1x1x1xf32>,
    } else {
    }
    return
  }
  func.func @transform_0(%arg0: i32, %arg1: i32) -> (i32, i32, i32) {
    %c0_i32 = arith.constant 0 : i32
    %c0_i32_0 = arith.constant 0 : i32
    %c0_i32_1 = arith.constant 0 : i32
    return %arg0, %c0_i32, %c0_i32_0 : i32, i32, i32
  }
  func.func @transform_1(%arg0: i32, %arg1: i32) -> (i32, i32, i32) {
    %c0_i32 = arith.constant 0 : i32
    %c0_i32_0 = arith.constant 0 : i32
    %c0_i32_1 = arith.constant 0 : i32
    return %arg0, %c0_i32, %c0_i32_0 : i32, i32, i32
  }
  func.func @transform_2(%arg0: i32, %arg1: i32) -> (i32, i32) {
    %c0_i32 = arith.constant 0 : i32
    %c0_i32_0 = arith.constant 0 : i32
    %c0_i32_1 = arith.constant 0 : i32
    return %c0_i32, %c0_i32_0 : i32, i32
  }
  func.func @transform_3(%arg0: i32, %arg1: i32) -> (i32, i32, i32) {
    %c0_i32 = arith.constant 0 : i32
    %c0_i32_0 = arith.constant 0 : i32
    %c0_i32_1 = arith.constant 0 : i32
    return %arg1, %c0_i32, %c0_i32_0 : i32, i32, i32
  }
  func.func @transform_4(%arg0: i32, %arg1: i32) -> (i32, i32, i32) {
    %c0_i32 = arith.constant 0 : i32
    %c0_i32_0 = arith.constant 0 : i32
    %c0_i32_1 = arith.constant 0 : i32
    return %arg1, %c0_i32, %c0_i32_0 : i32, i32, i32
  }
  func.func @transform_5(%arg0: i32, %arg1: i32) -> (i32, i32, i32) {
    %c0_i32 = arith.constant 0 : i32
    %c0_i32_0 = arith.constant 0 : i32
    %c0_i32_1 = arith.constant 0 : i32
    return %arg1, %c0_i32, %c0_i32_0 : i32, i32, i32
  }
  func.func @transform_6(%arg0: i32, %arg1: i32) -> (i32, i32, i32) {
    %c0_i32 = arith.constant 0 : i32
    %c0_i32_0 = arith.constant 0 : i32
    %c0_i32_1 = arith.constant 0 : i32
    return %arg1, %c0_i32, %c0_i32_0 : i32, i32, i32
  }
  func.func @transform_7(%arg0: i32, %arg1: i32) -> (i32, i32, i32) {
    %c0_i32 = arith.constant 0 : i32
    %c0_i32_0 = arith.constant 0 : i32
    %c0_i32_1 = arith.constant 0 : i32
    return %arg1, %c0_i32, %c0_i32_0 : i32, i32, i32
  }
  func.func @transform_8(%arg0: i32, %arg1: i32) -> (i32, i32, i32) {
    %c0_i32 = arith.constant 0 : i32
    %c0_i32_0 = arith.constant 0 : i32
    %c0_i32_1 = arith.constant 0 : i32
    return %arg1, %c0_i32, %c0_i32_0 : i32, i32, i32
  }
  func.func @transform_9(%arg0: i32, %arg1: i32) -> (i32, i32, i32) {
    %c0_i32 = arith.constant 0 : i32
    %c0_i32_0 = arith.constant 0 : i32
    %c0_i32_1 = arith.constant 0 : i32
    return %arg1, %c0_i32, %c0_i32_0 : i32, i32, i32
  }
  func.func @transform_10(%arg0: i32, %arg1: i32) -> (i32, i32, i32) {
    %c0_i32 = arith.constant 0 : i32
    %c0_i32_0 = arith.constant 0 : i32
    %c0_i32_1 = arith.constant 0 : i32
    return %arg1, %c0_i32, %c0_i32_0 : i32, i32, i32
  }
  func.func @transform_11(%arg0: i32, %arg1: i32) -> (i32, i32, i32) {
    %c0_i32 = arith.constant 0 : i32
    %c0_i32_0 = arith.constant 0 : i32
    %c0_i32_1 = arith.constant 0 : i32
    return %arg1, %c0_i32, %c0_i32_0 : i32, i32, i32
  }
  func.func @transform_12(%arg0: i32, %arg1: i32) -> (i32, i32, i32) {
    %c0_i32 = arith.constant 0 : i32
    %c0_i32_0 = arith.constant 0 : i32
    %c0_i32_1 = arith.constant 0 : i32
    return %arg1, %c0_i32, %c0_i32_0 : i32, i32, i32
  }
  func.func @transform_13(%arg0: i32, %arg1: i32) -> (i32, i32) {
    %c0_i32 = arith.constant 0 : i32
    %c0_i32_0 = arith.constant 0 : i32
    %c0_i32_1 = arith.constant 0 : i32
    return %c0_i32, %c0_i32_0 : i32, i32
  }
  func.func @transform_14(%arg0: i32, %arg1: i32) -> (i32, i32) {
    %c0_i32 = arith.constant 0 : i32
    %c0_i32_0 = arith.constant 0 : i32
    %c0_i32_1 = arith.constant 0 : i32
    return %c0_i32, %c0_i32_0 : i32, i32
  }
  func.func @transform_15(%arg0: i32, %arg1: i32) -> (i32, i32, i32) {
    %c0_i32 = arith.constant 0 : i32
    %c0_i32_0 = arith.constant 0 : i32
    %c0_i32_1 = arith.constant 0 : i32
    return %arg0, %c0_i32, %c0_i32_0 : i32, i32, i32
  }
}

</mosaic_0001>

<llo_original>
// kernel: forward.1
$region0: #{forward.1}
  #allocation0 [shape = 'u32[]', space=smem, size = 0x4, offset = 0x4, fixed_abs, tag = 'smem constant byte address 0x4 - core index']
  #allocation1 [shape = 'u32[144,128]{1,0:T(1,128)}', space=vmem, size = 0x12000, scoped, tag = 'internal scratch']
  #allocation2 [shape = 'f32[8,32]{1,0:T(8,128)}', space=vmem, size = 0x1000, scoped, tag = 'scratch operand']
  #allocation3 [shape = 'f32[1,1]{1,0:T(1,128)S(1)}', space=vmem, size = 0x200, scoped, tag = 'scoped memory for forward.1']
  %s0 = inlined_call_operand.vmem [shape: f32[2,8,32], index: 0, kind: input, shape index: {}]
  %s1 = inlined_call_operand.vmem [shape: f32[2,1,8], index: 1, kind: input, shape index: {}]
  %s2 = inlined_call_operand.vmem [shape: f32[2,32], index: 2, kind: input, shape index: {}]
  %s3 = inlined_call_operand.vmem [shape: bf16[2,32,96], index: 3, kind: input, shape index: {}]
  %s4 = inlined_call_operand.vmem [shape: f32[2,1,96], index: 4, kind: input, shape index: {}]
  %s5 = inlined_call_operand.vmem [shape: bf16[2,32,32], index: 5, kind: input, shape index: {}]
  %s6 = inlined_call_operand.vmem [shape: f32[2,1,32], index: 6, kind: input, shape index: {}]
  %s7 = inlined_call_operand.vmem [shape: f32[2,2,32], index: 7, kind: input, shape index: {}]
  %s8 = inlined_call_operand.vmem [shape: bf16[2,32,64], index: 8, kind: input, shape index: {}]
  %s9 = inlined_call_operand.vmem [shape: f32[2,1,64], index: 9, kind: input, shape index: {}]
  %s10 = inlined_call_operand.vmem [shape: bf16[2,64,32], index: 10, kind: input, shape index: {}]
  %s11 = inlined_call_operand.vmem [shape: f32[2,1,32], index: 11, kind: input, shape index: {}]
  %s12 = inlined_call_operand.vmem [shape: f32[2,2,32], index: 12, kind: input, shape index: {}]
  %s13 = inlined_call_operand.vmem [shape: f32[1,32], index: 13, kind: input, shape index: {}]
  %s14 = inlined_call_operand.<no memory space> [shape: f32[1,1], index: 14, kind: input, shape index: {}]
  %s15 = inlined_call_operand.vmem [shape: f32[2,1,1], index: 15, kind: output, shape index: {}]
  %s16 = sld [smem:[#allocation0]]
  $region101: #{forward.1} parent=0
    _
  %s18 = ssub.s32 1, %s16
  %s19 = scalar_select 0, %s18, %s16
  %v20 = vstv %s14
  %21 = vst [vmem:[#allocation3] sm:$0x1] %v20
  loop: start=0, step=1, limit=6
  $region2: #{forward.1} parent=0 // loop_pre_header
    _
  $region3: #{forward.1} parent=0 // loop_header
    %s23 = sphi 0, %s27
    %p24 = scmp.ge.s32.totalorder %s23, 6
    %s30 = sphi 0, %s42
    %s31 = sphi 0, %s38
    %s32 = sphi 0, %s30
    %s33 = sphi 0, %s31
    %s34 = sphi 0, %s32
    %s35 = sphi 0, %s33
    %s45 = sphi 0, %s47
    %s48 = sphi 0, %s45
    %s49 = sphi 0, %s48
    %s65 = sphi 0, %s49
    %s71 = sphi 0, %s73
    %s74 = sphi 0, %s71
    %s75 = sphi 0, %s74
    %s91 = sphi 0, %s75
    %s95 = sphi 0, %s95
    %s97 = sphi 0, %s95
    %s98 = sphi 0, %s97
    %s112 = sphi 0, %s98
    %s118 = sphi 0, %s120
    %s121 = sphi 0, %s118
    %s122 = sphi 0, %s121
    %s138 = sphi 0, %s122
    %s144 = sphi 0, %s146
    %s147 = sphi 0, %s144
    %s148 = sphi 0, %s147
    %s164 = sphi 0, %s148
    %s170 = sphi 0, %s172
    %s173 = sphi 0, %s170
    %s174 = sphi 0, %s173
    %s190 = sphi 0, %s174
    %s196 = sphi 0, %s198
    %s199 = sphi 0, %s196
    %s200 = sphi 0, %s199
    %s216 = sphi 0, %s200
    %s222 = sphi 0, %s224
    %s225 = sphi 0, %s222
    %s226 = sphi 0, %s225
    %s242 = sphi 0, %s226
    %s248 = sphi 0, %s250
    %s251 = sphi 0, %s248
    %s252 = sphi 0, %s251
    %s268 = sphi 0, %s252
    %s274 = sphi 0, %s276
    %s277 = sphi 0, %s274
    %s278 = sphi 0, %s277
    %s294 = sphi 0, %s278
    %s300 = sphi 0, %s302
    %s303 = sphi 0, %s300
    %s304 = sphi 0, %s303
    %s320 = sphi 0, %s304
    %s326 = sphi 0, %s328
    %s329 = sphi 0, %s326
    %s330 = sphi 0, %s329
    %s346 = sphi 0, %s330
    %s352 = sphi 0, %s354
    %s355 = sphi 0, %s352
    %s356 = sphi 0, %s355
    %s372 = sphi 0, %s356
    %s376 = sphi 0, %s376
    %s378 = sphi 0, %s376
    %s379 = sphi 0, %s378
    %s393 = sphi 0, %s379
    %s397 = sphi 0, %s397
    %s399 = sphi 0, %s397
    %s400 = sphi 0, %s399
    %s414 = sphi 0, %s400
    %s420 = sphi 0, %s422
    %s423 = sphi 0, %s420
    %s424 = sphi 0, %s423
    %s440 = sphi 0, %s424
  $region4: #{forward.1} parent=0 // loop_header_branch
    %26 = sbr.rel (%p24) target = $region8
  $region5: #{forward.1} parent=0 // loop_body
    %s28 = ssub.s32 %s23, 1
    %s29 = ssub.s32 %s23, 2
    %s36 = sadd.s32 1, %s31
    %p37 = scmp.ge.s32.totalorder %s36, 2
    %s38 = scalar_select %p37, 0, %s36
    %s39 = sadd.s32 1, %s30
    %s40 = scalar_select %p37, %s39, %s30
    %p41 = scmp.ge.s32.totalorder %s40, 2
    %s42 = scalar_select %p41, 0, %s40
    %s43 = ssub.s32 %s30, %s42
    %p44 = scmp.eq.s32.totalorder %s43, 0
    %s46 = sadd.s32 %s45, 1
    %s47 = scalar_select %p44, %s45, %s46
    %p50 = pneg %p44
    %p51 = scmp.eq.s32.totalorder %s23, 3
    %p52 = por %p50, %p51
    %p53 = scmp.ne.s32.totalorder %s45, %s48
    %p54 = scmp.eq.s32.totalorder %s23, 0
    %p55 = por %p53, %p54
    %p56 = scmp.ne.s32.totalorder %s45, %s48
    %p57 = scmp.eq.s32.totalorder %s28, 3
    %p58 = por %p56, %p57
    %p59 = scmp.ne.s32.totalorder %s48, %s49
    %p60 = scmp.eq.s32.totalorder %s28, 0
    %p61 = por %p59, %p60
    %p62 = scmp.ne.s32.totalorder %s48, %s49
    %p63 = scmp.eq.s32.totalorder %s29, 3
    %p64 = por %p62, %p63
    %p66 = scmp.ne.s32.totalorder %s49, %s65
    %p67 = scmp.eq.s32.totalorder %s29, 0
    %p68 = por %p66, %p67
    %s69 = ssub.s32 %s30, %s42
    %p70 = scmp.eq.s32.totalorder %s69, 0
    %s72 = sadd.s32 %s71, 1
    %s73 = scalar_select %p70, %s71, %s72
    %p76 = pneg %p70
    %p77 = scmp.eq.s32.totalorder %s23, 3
    %p78 = por %p76, %p77
    %p79 = scmp.ne.s32.totalorder %s71, %s74
    %p80 = scmp.eq.s32.totalorder %s23, 0
    %p81 = por %p79, %p80
    %p82 = scmp.ne.s32.totalorder %s71, %s74
    %p83 = scmp.eq.s32.totalorder %s28, 3
    %p84 = por %p82, %p83
    %p85 = scmp.ne.s32.totalorder %s74, %s75
    %p86 = scmp.eq.s32.totalorder %s28, 0
    %p87 = por %p85, %p86
    %p88 = scmp.ne.s32.totalorder %s74, %s75
    %p89 = scmp.eq.s32.totalorder %s29, 3
    %p90 = por %p88, %p89
    %p92 = scmp.ne.s32.totalorder %s75, %s91
    %p93 = scmp.eq.s32.totalorder %s29, 0
    %p94 = por %p92, %p93
    %s96 = sadd.s32 %s95, 1
    %p99 = scmp.eq.s32.totalorder %s23, 3
    %p100 = scmp.ne.s32.totalorder %s95, %s97
    %p101 = scmp.eq.s32.totalorder %s23, 0
    %p102 = por %p100, %p101
    %p103 = scmp.ne.s32.totalorder %s95, %s97
    %p104 = scmp.eq.s32.totalorder %s28, 3
    %p105 = por %p103, %p104
    %p106 = scmp.ne.s32.totalorder %s97, %s98
    %p107 = scmp.eq.s32.totalorder %s28, 0
    %p108 = por %p106, %p107
    %p109 = scmp.ne.s32.totalorder %s97, %s98
    %p110 = scmp.eq.s32.totalorder %s29, 3
    %p111 = por %p109, %p110
    %p113 = scmp.ne.s32.totalorder %s98, %s112
    %p114 = scmp.eq.s32.totalorder %s29, 0
    %p115 = por %p113, %p114
    %s116 = ssub.s32 %s31, %s38
    %p117 = scmp.eq.s32.totalorder %s116, 0
    %s119 = sadd.s32 %s118, 1
    %s120 = scalar_select %p117, %s118, %s119
    %p123 = pneg %p117
    %p124 = scmp.eq.s32.totalorder %s23, 3
    %p125 = por %p123, %p124
    %p126 = scmp.ne.s32.totalorder %s118, %s121
    %p127 = scmp.eq.s32.totalorder %s23, 0
    %p128 = por %p126, %p127
    %p129 = scmp.ne.s32.totalorder %s118, %s121
    %p130 = scmp.eq.s32.totalorder %s28, 3
    %p131 = por %p129, %p130
    %p132 = scmp.ne.s32.totalorder %s121, %s122
    %p133 = scmp.eq.s32.totalorder %s28, 0
    %p134 = por %p132, %p133
    %p135 = scmp.ne.s32.totalorder %s121, %s122
    %p136 = scmp.eq.s32.totalorder %s29, 3
    %p137 = por %p135, %p136
    %p139 = scmp.ne.s32.totalorder %s122, %s138
    %p140 = scmp.eq.s32.totalorder %s29, 0
    %p141 = por %p139, %p140
    %s142 = ssub.s32 %s31, %s38
    %p143 = scmp.eq.s32.totalorder %s142, 0
    %s145 = sadd.s32 %s144, 1
    %s146 = scalar_select %p143, %s144, %s145
    %p149 = pneg %p143
    %p150 = scmp.eq.s32.totalorder %s23, 3
    %p151 = por %p149, %p150
    %p152 = scmp.ne.s32.totalorder %s144, %s147
    %p153 = scmp.eq.s32.totalorder %s23, 0
    %p154 = por %p152, %p153
    %p155 = scmp.ne.s32.totalorder %s144, %s147
    %p156 = scmp.eq.s32.totalorder %s28, 3
    %p157 = por %p155, %p156
    %p158 = scmp.ne.s32.totalorder %s147, %s148
    %p159 = scmp.eq.s32.totalorder %s28, 0
    %p160 = por %p158, %p159
    %p161 = scmp.ne.s32.totalorder %s147, %s148
    %p162 = scmp.eq.s32.totalorder %s29, 3
    %p163 = por %p161, %p162
    %p165 = scmp.ne.s32.totalorder %s148, %s164
    %p166 = scmp.eq.s32.totalorder %s29, 0
    %p167 = por %p165, %p166
    %s168 = ssub.s32 %s31, %s38
    %p169 = scmp.eq.s32.totalorder %s168, 0
    %s171 = sadd.s32 %s170, 1
    %s172 = scalar_select %p169, %s170, %s171
    %p175 = pneg %p169
    %p176 = scmp.eq.s32.totalorder %s23, 3
    %p177 = por %p175, %p176
    %p178 = scmp.ne.s32.totalorder %s170, %s173
    %p179 = scmp.eq.s32.totalorder %s23, 0
    %p180 = por %p178, %p179
    %p181 = scmp.ne.s32.totalorder %s170, %s173
    %p182 = scmp.eq.s32.totalorder %s28, 3
    %p183 = por %p181, %p182
    %p184 = scmp.ne.s32.totalorder %s173, %s174
    %p185 = scmp.eq.s32.totalorder %s28, 0
    %p186 = por %p184, %p185
    %p187 = scmp.ne.s32.totalorder %s173, %s174
    %p188 = scmp.eq.s32.totalorder %s29, 3
    %p189 = por %p187, %p188
    %p191 = scmp.ne.s32.totalorder %s174, %s190
    %p192 = scmp.eq.s32.totalorder %s29, 0
    %p193 = por %p191, %p192
    %s194 = ssub.s32 %s31, %s38
    %p195 = scmp.eq.s32.totalorder %s194, 0
    %s197 = sadd.s32 %s196, 1
    %s198 = scalar_select %p195, %s196, %s197
    %p201 = pneg %p195
    %p202 = scmp.eq.s32.totalorder %s23, 3
    %p203 = por %p201, %p202
    %p204 = scmp.ne.s32.totalorder %s196, %s199
    %p205 = scmp.eq.s32.totalorder %s23, 0
    %p206 = por %p204, %p205
    %p207 = scmp.ne.s32.totalorder %s196, %s199
    %p208 = scmp.eq.s32.totalorder %s28, 3
    %p209 = por %p207, %p208
    %p210 = scmp.ne.s32.totalorder %s199, %s200
    %p211 = scmp.eq.s32.totalorder %s28, 0
    %p212 = por %p210, %p211
    %p213 = scmp.ne.s32.totalorder %s199, %s200
    %p214 = scmp.eq.s32.totalorder %s29, 3
    %p215 = por %p213, %p214
    %p217 = scmp.ne.s32.totalorder %s200, %s216
    %p218 = scmp.eq.s32.totalorder %s29, 0
    %p219 = por %p217, %p218
    %s220 = ssub.s32 %s31, %s38
    %p221 = scmp.eq.s32.totalorder %s220, 0
    %s223 = sadd.s32 %s222, 1
    %s224 = scalar_select %p221, %s222, %s223
    %p227 = pneg %p221
    %p228 = scmp.eq.s32.totalorder %s23, 3
    %p229 = por %p227, %p228
    %p230 = scmp.ne.s32.totalorder %s222, %s225
    %p231 = scmp.eq.s32.totalorder %s23, 0
    %p232 = por %p230, %p231
    %p233 = scmp.ne.s32.totalorder %s222, %s225
    %p234 = scmp.eq.s32.totalorder %s28, 3
    %p235 = por %p233, %p234
    %p236 = scmp.ne.s32.totalorder %s225, %s226
    %p237 = scmp.eq.s32.totalorder %s28, 0
    %p238 = por %p236, %p237
    %p239 = scmp.ne.s32.totalorder %s225, %s226
    %p240 = scmp.eq.s32.totalorder %s29, 3
    %p241 = por %p239, %p240
    %p243 = scmp.ne.s32.totalorder %s226, %s242
    %p244 = scmp.eq.s32.totalorder %s29, 0
    %p245 = por %p243, %p244
    %s246 = ssub.s32 %s31, %s38
    %p247 = scmp.eq.s32.totalorder %s246, 0
    %s249 = sadd.s32 %s248, 1
    %s250 = scalar_select %p247, %s248, %s249
    %p253 = pneg %p247
    %p254 = scmp.eq.s32.totalorder %s23, 3
    %p255 = por %p253, %p254
    %p256 = scmp.ne.s32.totalorder %s248, %s251
    %p257 = scmp.eq.s32.totalorder %s23, 0
    %p258 = por %p256, %p257
    %p259 = scmp.ne.s32.totalorder %s248, %s251
    %p260 = scmp.eq.s32.totalorder %s28, 3
    %p261 = por %p259, %p260
    %p262 = scmp.ne.s32.totalorder %s251, %s252
    %p263 = scmp.eq.s32.totalorder %s28, 0
    %p264 = por %p262, %p263
    %p265 = scmp.ne.s32.totalorder %s251, %s252
    %p266 = scmp.eq.s32.totalorder %s29, 3
    %p267 = por %p265, %p266
    %p269 = scmp.ne.s32.totalorder %s252, %s268
    %p270 = scmp.eq.s32.totalorder %s29, 0
    %p271 = por %p269, %p270
    %s272 = ssub.s32 %s31, %s38
    %p273 = scmp.eq.s32.totalorder %s272, 0
    %s275 = sadd.s32 %s274, 1
    %s276 = scalar_select %p273, %s274, %s275
    %p279 = pneg %p273
    %p280 = scmp.eq.s32.totalorder %s23, 3
    %p281 = por %p279, %p280
    %p282 = scmp.ne.s32.totalorder %s274, %s277
    %p283 = scmp.eq.s32.totalorder %s23, 0
    %p284 = por %p282, %p283
    %p285 = scmp.ne.s32.totalorder %s274, %s277
    %p286 = scmp.eq.s32.totalorder %s28, 3
    %p287 = por %p285, %p286
    %p288 = scmp.ne.s32.totalorder %s277, %s278
    %p289 = scmp.eq.s32.totalorder %s28, 0
    %p290 = por %p288, %p289
    %p291 = scmp.ne.s32.totalorder %s277, %s278
    %p292 = scmp.eq.s32.totalorder %s29, 3
    %p293 = por %p291, %p292
    %p295 = scmp.ne.s32.totalorder %s278, %s294
    %p296 = scmp.eq.s32.totalorder %s29, 0
    %p297 = por %p295, %p296
    %s298 = ssub.s32 %s31, %s38
    %p299 = scmp.eq.s32.totalorder %s298, 0
    %s301 = sadd.s32 %s300, 1
    %s302 = scalar_select %p299, %s300, %s301
    %p305 = pneg %p299
    %p306 = scmp.eq.s32.totalorder %s23, 3
    %p307 = por %p305, %p306
    %p308 = scmp.ne.s32.totalorder %s300, %s303
    %p309 = scmp.eq.s32.totalorder %s23, 0
    %p310 = por %p308, %p309
    %p311 = scmp.ne.s32.totalorder %s300, %s303
    %p312 = scmp.eq.s32.totalorder %s28, 3
    %p313 = por %p311, %p312
    %p314 = scmp.ne.s32.totalorder %s303, %s304
    %p315 = scmp.eq.s32.totalorder %s28, 0
    %p316 = por %p314, %p315
    %p317 = scmp.ne.s32.totalorder %s303, %s304
    %p318 = scmp.eq.s32.totalorder %s29, 3
    %p319 = por %p317, %p318
    %p321 = scmp.ne.s32.totalorder %s304, %s320
    %p322 = scmp.eq.s32.totalorder %s29, 0
    %p323 = por %p321, %p322
    %s324 = ssub.s32 %s31, %s38
    %p325 = scmp.eq.s32.totalorder %s324, 0
    %s327 = sadd.s32 %s326, 1
    %s328 = scalar_select %p325, %s326, %s327
    %p331 = pneg %p325
    %p332 = scmp.eq.s32.totalorder %s23, 3
    %p333 = por %p331, %p332
    %p334 = scmp.ne.s32.totalorder %s326, %s329
    %p335 = scmp.eq.s32.totalorder %s23, 0
    %p336 = por %p334, %p335
    %p337 = scmp.ne.s32.totalorder %s326, %s329
    %p338 = scmp.eq.s32.totalorder %s28, 3
    %p339 = por %p337, %p338
    %p340 = scmp.ne.s32.totalorder %s329, %s330
    %p341 = scmp.eq.s32.totalorder %s28, 0
    %p342 = por %p340, %p341
    %p343 = scmp.ne.s32.totalorder %s329, %s330
    %p344 = scmp.eq.s32.totalorder %s29, 3
    %p345 = por %p343, %p344
    %p347 = scmp.ne.s32.totalorder %s330, %s346
    %p348 = scmp.eq.s32.totalorder %s29, 0
    %p349 = por %p347, %p348
    %s350 = ssub.s32 %s31, %s38
    %p351 = scmp.eq.s32.totalorder %s350, 0
    %s353 = sadd.s32 %s352, 1
    %s354 = scalar_select %p351, %s352, %s353
    %p357 = pneg %p351
    %p358 = scmp.eq.s32.totalorder %s23, 3
    %p359 = por %p357, %p358
    %p360 = scmp.ne.s32.totalorder %s352, %s355
    %p361 = scmp.eq.s32.totalorder %s23, 0
    %p362 = por %p360, %p361
    %p363 = scmp.ne.s32.totalorder %s352, %s355
    %p364 = scmp.eq.s32.totalorder %s28, 3
    %p365 = por %p363, %p364
    %p366 = scmp.ne.s32.totalorder %s355, %s356
    %p367 = scmp.eq.s32.totalorder %s28, 0
    %p368 = por %p366, %p367
    %p369 = scmp.ne.s32.totalorder %s355, %s356
    %p370 = scmp.eq.s32.totalorder %s29, 3
    %p371 = por %p369, %p370
    %p373 = scmp.ne.s32.totalorder %s356, %s372
    %p374 = scmp.eq.s32.totalorder %s29, 0
    %p375 = por %p373, %p374
    %s377 = sadd.s32 %s376, 1
    %p380 = scmp.eq.s32.totalorder %s23, 3
    %p381 = scmp.ne.s32.totalorder %s376, %s378
    %p382 = scmp.eq.s32.totalorder %s23, 0
    %p383 = por %p381, %p382
    %p384 = scmp.ne.s32.totalorder %s376, %s378
    %p385 = scmp.eq.s32.totalorder %s28, 3
    %p386 = por %p384, %p385
    %p387 = scmp.ne.s32.totalorder %s378, %s379
    %p388 = scmp.eq.s32.totalorder %s28, 0
    %p389 = por %p387, %p388
    %p390 = scmp.ne.s32.totalorder %s378, %s379
    %p391 = scmp.eq.s32.totalorder %s29, 3
    %p392 = por %p390, %p391
    %p394 = scmp.ne.s32.totalorder %s379, %s393
    %p395 = scmp.eq.s32.totalorder %s29, 0
    %p396 = por %p394, %p395
    %s398 = sadd.s32 %s397, 1
    %p401 = scmp.eq.s32.totalorder %s23, 3
    %p402 = scmp.ne.s32.totalorder %s397, %s399
    %p403 = scmp.eq.s32.totalorder %s23, 0
    %p404 = por %p402, %p403
    %p405 = scmp.ne.s32.totalorder %s397, %s399
    %p406 = scmp.eq.s32.totalorder %s28, 3
    %p407 = por %p405, %p406
    %p408 = scmp.ne.s32.totalorder %s399, %s400
    %p409 = scmp.eq.s32.totalorder %s28, 0
    %p410 = por %p408, %p409
    %p411 = scmp.ne.s32.totalorder %s399, %s400
    %p412 = scmp.eq.s32.totalorder %s29, 3
    %p413 = por %p411, %p412
    %p415 = scmp.ne.s32.totalorder %s400, %s414
    %p416 = scmp.eq.s32.totalorder %s29, 0
    %p417 = por %p415, %p416
    %s418 = ssub.s32 %s30, %s42
    %p419 = scmp.eq.s32.totalorder %s418, 0
    %s421 = sadd.s32 %s420, 1
    %s422 = scalar_select %p419, %s420, %s421
    %p425 = pneg %p419
    %p426 = scmp.eq.s32.totalorder %s23, 3
    %p427 = por %p425, %p426
    %p428 = scmp.ne.s32.totalorder %s420, %s423
    %p429 = scmp.eq.s32.totalorder %s23, 0
    %p430 = por %p428, %p429
    %p431 = scmp.ne.s32.totalorder %s420, %s423
    %p432 = scmp.eq.s32.totalorder %s28, 3
    %p433 = por %p431, %p432
    %p434 = scmp.ne.s32.totalorder %s423, %s424
    %p435 = scmp.eq.s32.totalorder %s28, 0
    %p436 = por %p434, %p435
    %p437 = scmp.ne.s32.totalorder %s423, %s424
    %p438 = scmp.eq.s32.totalorder %s29, 3
    %p439 = por %p437, %p438
    %p441 = scmp.ne.s32.totalorder %s424, %s440
    %p442 = scmp.eq.s32.totalorder %s29, 0
    %p443 = por %p441, %p442
    %p444 = scmp.le.s32.totalorder 1, %s23
    %p445 = scmp.lt.s32.totalorder %s23, 5
    %p446 = pnand %p444, %p445
    %p447 = pneg %p446
    // Predicated region
    $region9: #{forward.1} parent=5 // pred_check
      _
    $region10: #{forward.1} parent=5 // pred_check_branch
      %449 = sbr.rel (%p446) target = $region12
    $region11: #{forward.1} parent=5 // pred_region
      %s450 = ssub.s32 %s23, 1
      // Predicated region
      $region13: #{forward.1} parent=11 // pred_check
        %p451 = pneg %p108
      $region14: #{forward.1} parent=11 // pred_check_branch
        %453 = sbr.rel (%p451) target = $region16
      $region15: #{forward.1} parent=11 // pred_region
        _
      $region16: #{forward.1} parent=11 // pred_fallthru
        _
      // Predicated region
      $region17: #{forward.1} parent=11 // pred_check
        %p454 = pneg %p389
      $region18: #{forward.1} parent=11 // pred_check_branch
        %456 = sbr.rel (%p454) target = $region20
      $region19: #{forward.1} parent=11 // pred_region
        _
      $region20: #{forward.1} parent=11 // pred_fallthru
        _
      // Predicated region
      $region21: #{forward.1} parent=11 // pred_check
        %p457 = pneg %p410
      $region22: #{forward.1} parent=11 // pred_check_branch
        %459 = sbr.rel (%p457) target = $region24
      $region23: #{forward.1} parent=11 // pred_region
        _
      $region24: #{forward.1} parent=11 // pred_fallthru
        _
    $region12: #{forward.1} parent=5 // pred_fallthru
      _
    %p460 = scmp.lt.s32.totalorder %s23, 4
    // Predicated region
    $region25: #{forward.1} parent=5 // pred_check
      %p461 = pneg %p460
    $region26: #{forward.1} parent=5 // pred_check_branch
      %463 = sbr.rel (%p461) target = $region28
    $region27: #{forward.1} parent=5 // pred_region
      // Predicated region
      $region29: #{forward.1} parent=27 // pred_check
        %p464 = pneg %p55
      $region30: #{forward.1} parent=27 // pred_check_branch
        %466 = sbr.rel (%p464) target = $region32
      $region31: #{forward.1} parent=27 // pred_region
        %p467 = scmp.lt.s32.totalorder %s30, 1
        %s468 = scalar_select %p467, %s30, 1
        %s469 = smul.addr %s468, 8
        %s470 = scalar_lea.vmem %s0, %s469
      $region32: #{forward.1} parent=27 // pred_fallthru
        _
      // Predicated region
      $region33: #{forward.1} parent=27 // pred_check
        %p471 = pneg %p81
      $region34: #{forward.1} parent=27 // pred_check_branch
        %473 = sbr.rel (%p471) target = $region36
      $region35: #{forward.1} parent=27 // pred_region
        %p474 = scmp.lt.s32.totalorder %s30, 1
        %s475 = scalar_select %p474, %s30, 1
        %s476 = scalar_lea.vmem %s1, %s475
      $region36: #{forward.1} parent=27 // pred_fallthru
        _
      // Predicated region
      $region37: #{forward.1} parent=27 // pred_check
        %p477 = pneg %p128
      $region38: #{forward.1} parent=27 // pred_check_branch
        %479 = sbr.rel (%p477) target = $region40
      $region39: #{forward.1} parent=27 // pred_region
        %p480 = scmp.lt.s32.totalorder %s31, 1
        %s481 = scalar_select %p480, %s31, 1
        %s482 = smul.addr %s481, 4
        %s483 = smul.addr %s482, 4
        %s484 = scalar_lea.vmem %s3, %s483
      $region40: #{forward.1} parent=27 // pred_fallthru
        _
      // Predicated region
      $region41: #{forward.1} parent=27 // pred_check
        %p485 = pneg %p154
      $region42: #{forward.1} parent=27 // pred_check_branch
        %487 = sbr.rel (%p485) target = $region44
      $region43: #{forward.1} parent=27 // pred_region
        %p488 = scmp.lt.s32.totalorder %s31, 1
        %s489 = scalar_select %p488, %s31, 1
        %s490 = scalar_lea.vmem %s4, %s489
      $region44: #{forward.1} parent=27 // pred_fallthru
        _
      // Predicated region
      $region45: #{forward.1} parent=27 // pred_check
        %p491 = pneg %p180
      $region46: #{forward.1} parent=27 // pred_check_branch
        %493 = sbr.rel (%p491) target = $region48
      $region47: #{forward.1} parent=27 // pred_region
        %p494 = scmp.lt.s32.totalorder %s31, 1
        %s495 = scalar_select %p494, %s31, 1
        %s496 = smul.addr %s495, 4
        %s497 = smul.addr %s496, 4
        %s498 = scalar_lea.vmem %s5, %s497
      $region48: #{forward.1} parent=27 // pred_fallthru
        _
      // Predicated region
      $region49: #{forward.1} parent=27 // pred_check
        %p499 = pneg %p206
      $region50: #{forward.1} parent=27 // pred_check_branch
        %501 = sbr.rel (%p499) target = $region52
      $region51: #{forward.1} parent=27 // pred_region
        %p502 = scmp.lt.s32.totalorder %s31, 1
        %s503 = scalar_select %p502, %s31, 1
        %s504 = scalar_lea.vmem %s6, %s503
      $region52: #{forward.1} parent=27 // pred_fallthru
        _
      // Predicated region
      $region53: #{forward.1} parent=27 // pred_check
        %p505 = pneg %p232
      $region54: #{forward.1} parent=27 // pred_check_branch
        %507 = sbr.rel (%p505) target = $region56
      $region55: #{forward.1} parent=27 // pred_region
        %p508 = scmp.lt.s32.totalorder %s31, 1
        %s509 = scalar_select %p508, %s31, 1
        %s510 = smul.addr %s509, 2
        %s511 = scalar_lea.vmem %s7, %s510
      $region56: #{forward.1} parent=27 // pred_fallthru
        _
      // Predicated region
      $region57: #{forward.1} parent=27 // pred_check
        %p512 = pneg %p258
      $region58: #{forward.1} parent=27 // pred_check_branch
        %514 = sbr.rel (%p512) target = $region60
      $region59: #{forward.1} parent=27 // pred_region
        %p515 = scmp.lt.s32.totalorder %s31, 1
        %s516 = scalar_select %p515, %s31, 1
        %s517 = smul.addr %s516, 4
        %s518 = smul.addr %s517, 4
        %s519 = scalar_lea.vmem %s8, %s518
      $region60: #{forward.1} parent=27 // pred_fallthru
        _
      // Predicated region
      $region61: #{forward.1} parent=27 // pred_check
        %p520 = pneg %p284
      $region62: #{forward.1} parent=27 // pred_check_branch
        %522 = sbr.rel (%p520) target = $region64
      $region63: #{forward.1} parent=27 // pred_region
        %p523 = scmp.lt.s32.totalorder %s31, 1
        %s524 = scalar_select %p523, %s31, 1
        %s525 = scalar_lea.vmem %s9, %s524
      $region64: #{forward.1} parent=27 // pred_fallthru
        _
      // Predicated region
      $region65: #{forward.1} parent=27 // pred_check
        %p526 = pneg %p310
      $region66: #{forward.1} parent=27 // pred_check_branch
        %528 = sbr.rel (%p526) target = $region68
      $region67: #{forward.1} parent=27 // pred_region
        %p529 = scmp.lt.s32.totalorder %s31, 1
        %s530 = scalar_select %p529, %s31, 1
        %s531 = smul.addr %s530, 8
        %s532 = smul.addr %s531, 4
        %s533 = scalar_lea.vmem %s10, %s532
      $region68: #{forward.1} parent=27 // pred_fallthru
        _
      // Predicated region
      $region69: #{forward.1} parent=27 // pred_check
        %p534 = pneg %p336
      $region70: #{forward.1} parent=27 // pred_check_branch
        %536 = sbr.rel (%p534) target = $region72
      $region71: #{forward.1} parent=27 // pred_region
        %p537 = scmp.lt.s32.totalorder %s31, 1
        %s538 = scalar_select %p537, %s31, 1
        %s539 = scalar_lea.vmem %s11, %s538
      $region72: #{forward.1} parent=27 // pred_fallthru
        _
      // Predicated region
      $region73: #{forward.1} parent=27 // pred_check
        %p540 = pneg %p362
      $region74: #{forward.1} parent=27 // pred_check_branch
        %542 = sbr.rel (%p540) target = $region76
      $region75: #{forward.1} parent=27 // pred_region
        %p543 = scmp.lt.s32.totalorder %s31, 1
        %s544 = scalar_select %p543, %s31, 1
        %s545 = smul.addr %s544, 2
        %s546 = scalar_lea.vmem %s12, %s545
      $region76: #{forward.1} parent=27 // pred_fallthru
        _
    $region28: #{forward.1} parent=5 // pred_fallthru
      _
    %p547 = scmp.le.s32.totalorder 1, %s23
    %p548 = scmp.lt.s32.totalorder %s23, 5
    %p549 = pnand %p547, %p548
    %p550 = pneg %p549
    // Predicated region
    $region77: #{forward.1} parent=5 // pred_check
      _
    $region78: #{forward.1} parent=5 // pred_check_branch
      %552 = sbr.rel (%p549) target = $region80
    $region79: #{forward.1} parent=5 // pred_region
      %s553 = ssub.s32 %s23, 1
      %p554 = scmp.lt.s32.totalorder %s32, 1
      %s555 = scalar_select %p554, %s32, 1
      %s556 = smul.addr %s555, 8
      %s557 = scalar_lea.vmem %s0, %s556
      %p558 = pneg %p61
      %p559 = pneg %p58
      %p560 = scmp.lt.s32.totalorder %s32, 1
      %s561 = scalar_select %p560, %s32, 1
      %s562 = scalar_lea.vmem %s1, %s561
      %p563 = pneg %p87
      %p564 = pneg %p84
      %p565 = pneg %p108
      %p566 = pneg %p105
      %p567 = scmp.lt.s32.totalorder %s33, 1
      %s568 = scalar_select %p567, %s33, 1
      %s569 = smul.addr %s568, 4
      %s570 = smul.addr %s569, 4
      %s571 = scalar_lea.vmem %s3, %s570
      %p572 = pneg %p134
      %p573 = pneg %p131
      %p574 = scmp.lt.s32.totalorder %s33, 1
      %s575 = scalar_select %p574, %s33, 1
      %s576 = scalar_lea.vmem %s4, %s575
      %p577 = pneg %p160
      %p578 = pneg %p157
      %p579 = scmp.lt.s32.totalorder %s33, 1
      %s580 = scalar_select %p579, %s33, 1
      %s581 = smul.addr %s580, 4
      %s582 = smul.addr %s581, 4
      %s583 = scalar_lea.vmem %s5, %s582
      %p584 = pneg %p186
      %p585 = pneg %p183
      %p586 = scmp.lt.s32.totalorder %s33, 1
      %s587 = scalar_select %p586, %s33, 1
      %s588 = scalar_lea.vmem %s6, %s587
      %p589 = pneg %p212
      %p590 = pneg %p209
      %p591 = scmp.lt.s32.totalorder %s33, 1
      %s592 = scalar_select %p591, %s33, 1
      %s593 = smul.addr %s592, 2
      %s594 = scalar_lea.vmem %s7, %s593
      %p595 = pneg %p238
      %p596 = pneg %p235
      %p597 = scmp.lt.s32.totalorder %s33, 1
      %s598 = scalar_select %p597, %s33, 1
      %s599 = smul.addr %s598, 4
      %s600 = smul.addr %s599, 4
      %s601 = scalar_lea.vmem %s8, %s600
      %p602 = pneg %p264
      %p603 = pneg %p261
      %p604 = scmp.lt.s32.totalorder %s33, 1
      %s605 = scalar_select %p604, %s33, 1
      %s606 = scalar_lea.vmem %s9, %s605
      %p607 = pneg %p290
      %p608 = pneg %p287
      %p609 = scmp.lt.s32.totalorder %s33, 1
      %s610 = scalar_select %p609, %s33, 1
      %s611 = smul.addr %s610, 8
      %s612 = smul.addr %s611, 4
      %s613 = scalar_lea.vmem %s10, %s612
      %p614 = pneg %p316
      %p615 = pneg %p313
      %p616 = scmp.lt.s32.totalorder %s33, 1
      %s617 = scalar_select %p616, %s33, 1
      %s618 = scalar_lea.vmem %s11, %s617
      %p619 = pneg %p342
      %p620 = pneg %p339
      %p621 = scmp.lt.s32.totalorder %s33, 1
      %s622 = scalar_select %p621, %s33, 1
      %s623 = smul.addr %s622, 2
      %s624 = scalar_lea.vmem %s12, %s623
      %p625 = pneg %p368
      %p626 = pneg %p365
      %p627 = pneg %p389
      %p628 = pneg %p386
      %p629 = pneg %p410
      %p630 = pneg %p407
      %p631 = pneg %p436
      %p632 = pneg %p433
      %p633 = scmp.lt.s32.totalorder %s32, 1
      %s634 = scalar_select %p633, %s32, 1
      %s635 = scalar_lea.vmem %s15, %s634
      %p636 = scmp.lt.s32.totalorder %s32, 1
      %s637 = scalar_select %p636, %s32, 1
      %s638 = smul.addr %s637, 8
      %s639 = scalar_lea.vmem %s0, %s638
      %p640 = scmp.lt.s32.totalorder %s32, 1
      %s641 = scalar_select %p640, %s32, 1
      %s642 = scalar_lea.vmem %s1, %s641
      %p643 = scmp.lt.s32.totalorder %s33, 1
      %s644 = scalar_select %p643, %s33, 1
      %s645 = smul.addr %s644, 4
      %s646 = smul.addr %s645, 4
      %s647 = scalar_lea.vmem %s3, %s646
      %p648 = scmp.lt.s32.totalorder %s33, 1
      %s649 = scalar_select %p648, %s33, 1
      %s650 = scalar_lea.vmem %s4, %s649
      %p651 = scmp.lt.s32.totalorder %s33, 1
      %s652 = scalar_select %p651, %s33, 1
      %s653 = smul.addr %s652, 4
      %s654 = smul.addr %s653, 4
      %s655 = scalar_lea.vmem %s5, %s654
      %p656 = scmp.lt.s32.totalorder %s33, 1
      %s657 = scalar_select %p656, %s33, 1
      %s658 = scalar_lea.vmem %s6, %s657
      %p659 = scmp.lt.s32.totalorder %s33, 1
      %s660 = scalar_select %p659, %s33, 1
      %s661 = smul.addr %s660, 2
      %s662 = scalar_lea.vmem %s7, %s661
      %p663 = scmp.lt.s32.totalorder %s33, 1
      %s664 = scalar_select %p663, %s33, 1
      %s665 = smul.addr %s664, 4
      %s666 = smul.addr %s665, 4
      %s667 = scalar_lea.vmem %s8, %s666
      %p668 = scmp.lt.s32.totalorder %s33, 1
      %s669 = scalar_select %p668, %s33, 1
      %s670 = scalar_lea.vmem %s9, %s669
      %p671 = scmp.lt.s32.totalorder %s33, 1
      %s672 = scalar_select %p671, %s33, 1
      %s673 = smul.addr %s672, 8
      %s674 = smul.addr %s673, 4
      %s675 = scalar_lea.vmem %s10, %s674
      %p676 = scmp.lt.s32.totalorder %s33, 1
      %s677 = scalar_select %p676, %s33, 1
      %s678 = scalar_lea.vmem %s11, %s677
      %p679 = scmp.lt.s32.totalorder %s33, 1
      %s680 = scalar_select %p679, %s33, 1
      %s681 = smul.addr %s680, 2
      %s682 = scalar_lea.vmem %s12, %s681
      %p683 = scmp.lt.s32.totalorder %s32, 1
      %s684 = scalar_select %p683, %s32, 1
      %s685 = scalar_lea.vmem %s15, %s684
      %p687 = scmp.eq.s32.totalorder %s33, 0
      // Predicated region
      $region81: #{forward.1} parent=79 // pred_check
        %p688 = pneg %p687
      $region82: #{forward.1} parent=79 // pred_check_branch
        %690 = sbr.rel (%p688) target = $region84
      $region83: #{forward.1} parent=79 // pred_region
        %v691 = vld [vmem:[%s639] sm:$0xff]
        %v692 = vld [vmem:[%s2] sm:$0x3]
        %vm693 = vcmask 261120
        %v694 = vsel %vm693, %v691, 0.0
        %695 = vadd.xlane.f32.xlu0 %v694
        %v696 = vpop.xlane.xlu0 %695
        %v697 = vrcp.pop 32.0
        %v698 = vmul.f32 %v696, %v697
        %v699 = vsub.f32 %v691, %v698
        %v700 = vmul.f32 %v699, %v699
        %v701 = vsel %vm693, %v700, 0.0
        %702 = vadd.xlane.f32.xlu0 %v701
        %v703 = vpop.xlane.xlu0 %702
        %v704 = vmul.f32 %v703, %v697
        %v705 = vadd.f32 %v704, 1e-12
        %v706 = vrsqrt.pop %v705
        %v707 = vmul.f32 %v699, %v706
        %v708 = vlaneseq
        %v709 = vshrl.u32 %v708, 7
        %v710 = vsub.s32 0, %v709
        %v711 = vrot.slane %v692, %v710
        %v712 = vmul.f32 %v707, %v711
        %v713 = vlaneseq
        %v714 = vshrl.u32 %v713, 7
        %v715 = vsub.s32 1, %v714
        %v716 = vrot.slane %v692, %v715
        %v717 = vadd.f32 %v712, %v716
        %718 = vst.msk [vmem:[#allocation2] sm:$0xff] %vm693, %v717
      $region84: #{forward.1} parent=79 // pred_fallthru
        _
      %v719 = vld [vmem:[#allocation2] sm:$0xff]
      %v720 = vld [vmem:[%s642] sm:$0x1]
      %v721 = vsub.f32 1.0, %v720
      %v722 = vmul.f32 %v721, -10000.0
      %v723 = vld [vmem:[%s647] sm:$0xf]
      %v724 = vld [vmem:[%s647 + $0x4] sm:$0xf]
      %v725 = vld [vmem:[%s647 + $0x8] sm:$0xf]
      %v726 = vld [vmem:[%s647 + $0xc] sm:$0xf]
      %v727 = vld [vmem:[%s650] sm:$0x1]
      %v728 = vld [vmem:[%s655] sm:$0xf]
      %v729 = vld [vmem:[%s655 + $0x4] sm:$0xf]
      %v730 = vld [vmem:[%s655 + $0x8] sm:$0xf]
      %v731 = vld [vmem:[%s655 + $0xc] sm:$0xf]
      %v732 = vld [vmem:[%s658] sm:$0x1]
      %v733 = vld [vmem:[%s662] sm:$0x3]
      %v734 = vld [vmem:[%s667] sm:$0xf]
      %v735 = vld [vmem:[%s667 + $0x4] sm:$0xf]
      %v736 = vld [vmem:[%s667 + $0x8] sm:$0xf]
      %v737 = vld [vmem:[%s667 + $0xc] sm:$0xf]
      %v738 = vld [vmem:[%s670] sm:$0x1]
      %v739 = vld [vmem:[%s675] sm:$0xf]
      %v740 = vld [vmem:[%s675 + $0x4] sm:$0xf]
      %v741 = vld [vmem:[%s675 + $0x8] sm:$0xf]
      %v742 = vld [vmem:[%s675 + $0xc] sm:$0xf]
      %v743 = vld [vmem:[%s675 + $0x10] sm:$0xf]
      %v744 = vld [vmem:[%s675 + $0x14] sm:$0xf]
      %v745 = vld [vmem:[%s675 + $0x18] sm:$0xf]
      %v746 = vld [vmem:[%s675 + $0x1c] sm:$0xf]
      %v747 = vld [vmem:[%s678] sm:$0x1]
      %v748 = vld [vmem:[%s682] sm:$0x3]
      %v749 = vpack.c.bf16 %v719, %v719
      %v751 = vlaneseq
      %v752 = vshrl.u32 %v751, 7
      %v753 = vsub.s32 0, %v752
      %v754 = vrot.slane %v727, %v753
      %v760 = vunpack.c.l.b16 %v723
      %v761 = vunpack.c.l.b16 %v724
      %v762 = vunpack.c.l.b16 %v725
      %v763 = vunpack.c.l.b16 %v726
      %v764 = vpack.c.b16 %v761, %v760
      %v765 = vpack.c.b16 %v763, %v762
      %vm768 = vcmask 261120
      %v770 = vsel %vm768, %v749, 0
      %772 = vmatprep.subr.bf16.mxu0 0
      %773 = vmatpush1.bf16.msra.mxu0 0
      %774 = vmatprep.subr.bf16.mxu0 0
      %775 = vmatpush1.bf16.msra.mxu0 0
      %776 = vmatprep.subr.bf16.mxu0 0
      %777 = vmatpush1.bf16.msra.mxu0 0
      %778 = vmatprep.subr.bf16.mxu0 0
      %779 = vmatpush1.bf16.msra.mxu0 0
      %780 = vmatprep.subr.bf16.mxu0 0
      %781 = vmatpush1.bf16.msra.mxu0 0
      %782 = vmatprep.subr.bf16.mxu0 0
      %783 = vmatpush1.bf16.msra.mxu0 0
      %784 = vmatprep.subr.bf16.mxu0 0
      %785 = vmatpush1.bf16.msra.mxu0 %v765
      %786 = vmatprep.subr.bf16.mxu0 0
      %787 = vmatpush1.bf16.msra.mxu0 %v764
      %788 = vmatprep.subr.bf16.mxu0 0
      %789 = vmatpush2.bf16.msra.mxu0 0
      %790 = vmatprep.subr.bf16.mxu0 0
      %791 = vmatpush2.bf16.msra.mxu0 0
      %792 = vmatprep.subr.bf16.mxu0 0
      %793 = vmatpush2.bf16.msra.mxu0 0
      %794 = vmatprep.subr.bf16.mxu0 0
      %795 = vmatpush2.bf16.msra.mxu0 0
      %796 = vmatprep.subr.bf16.mxu0 0
      %797 = vmatpush2.bf16.msra.mxu0 0
      %798 = vmatprep.subr.bf16.mxu0 0
      %799 = vmatpush2.bf16.msra.mxu0 0
      %800 = vmatprep.subr.bf16.mxu0 0
      %801 = vmatpush2.bf16.msra.mxu0 0
      %802 = vmatprep.subr.bf16.mxu0 0
      %803 = vmatpush2.bf16.msra.mxu0 0
      %804 = vmatprep.mubr.bf16.mxu0 0
      %805 = vmatmul.mubr.bf16.gmra.mxu0 %v770
      %v806 = vpop.f32.mrf.mxu0
      %v807 = vadd.f32 %v754, %v806
      %v808 = vpop.f32.mrf.mxu0
      %v809 = vpop.f32.mrf.mxu0
      %v810 = vpop.f32.mrf.mxu0
      %811 = vdwg.mxu0
      %v812 = vpack.c.bf16 %v807, %v807
      %814 = vrot.lane.b32.xlu0 %v812, 96
      %v815 = vpop.permute.xlu0 %814
      %vm816 = vcmask 130048
      %v818 = vsel %vm816, %v812, 0
      %v821 = vsel %vm816, %v815, 0
      %823 = vmatprep.subr.bf16.mxu0 0
      %824 = vmatpush1.bf16.xpose.msra.mxu0 0
      %825 = vmatprep.subr.bf16.mxu0 0
      %826 = vmatpush1.bf16.xpose.msra.mxu0 0
      %827 = vmatprep.subr.bf16.mxu0 0
      %828 = vmatpush1.bf16.xpose.msra.mxu0 0
      %829 = vmatprep.subr.bf16.mxu0 0
      %830 = vmatpush1.bf16.xpose.msra.mxu0 0
      %831 = vmatprep.subr.bf16.mxu0 0
      %832 = vmatpush1.bf16.xpose.msra.mxu0 0
      %833 = vmatprep.subr.bf16.mxu0 0
      %834 = vmatpush1.bf16.xpose.msra.mxu0 0
      %835 = vmatprep.subr.bf16.mxu0 0
      %836 = vmatpush1.bf16.xpose.msra.mxu0 0
      %837 = vmatprep.subr.bf16.mxu0 0
      %838 = vmatpush1.bf16.xpose.msra.mxu0 %v821
      %839 = vmatprep.subr.bf16.mxu0 0
      %840 = vmatpush2.bf16.xpose.msra.mxu0 0
      %841 = vmatprep.subr.bf16.mxu0 0
      %842 = vmatpush2.bf16.xpose.msra.mxu0 0
      %843 = vmatprep.subr.bf16.mxu0 0
      %844 = vmatpush2.bf16.xpose.msra.mxu0 0
      %845 = vmatprep.subr.bf16.mxu0 0
      %846 = vmatpush2.bf16.xpose.msra.mxu0 0
      %847 = vmatprep.subr.bf16.mxu0 0
      %848 = vmatpush2.bf16.xpose.msra.mxu0 0
      %849 = vmatprep.subr.bf16.mxu0 0
      %850 = vmatpush2.bf16.xpose.msra.mxu0 0
      %851 = vmatprep.subr.bf16.mxu0 0
      %852 = vmatpush2.bf16.xpose.msra.mxu0 0
      %853 = vmatprep.subr.bf16.mxu0 0
      %854 = vmatpush2.bf16.xpose.msra.mxu0 0
      %855 = vmatprep.mubr.bf16.mxu0 0
      %856 = vmatmul.mubr.bf16.gmra.mxu0 %v818
      %v857 = vpop.f32.mrf.mxu0
      %v858 = vadd.f32 0.0, %v857
      %v859 = vpop.f32.mrf.mxu0
      %v860 = vpop.f32.mrf.mxu0
      %v861 = vpop.f32.mrf.mxu0
      %862 = vdwg.mxu0
      %v863 = vmul.f32 %v858, 0.25
      %v865 = vlaneseq
      %v866 = vshrl.u32 %v865, 7
      %v867 = vsub.s32 0, %v866
      %v868 = vrot.slane %v722, %v867
      %v870 = vadd.f32 %v863, %v868
      %vm871 = vcmask 64512
      %v872 = vsel %vm871, %v870, -inf
      %873 = vmax.xlane.f32.xlu0 %v872
      %v874 = vpop.xlane.xlu0 %873
      %v875 = vsub.f32 %v870, %v874
      %v876 = vmul.f32 %v875, 1.442695
      %v877 = vpow.pop %v876
      %v878 = vsel %vm871, %v877, 0.0
      %879 = vadd.xlane.f32.xlu0 %v878
      %v880 = vpop.xlane.xlu0 %879
      %v881 = vrcp.pop %v880
      %v882 = vmul.f32 %v877, %v881
      %v883 = vpack.c.bf16 %v882, %v882
      %884 = vrot.lane.b32.xlu0 %v812, 64
      %v885 = vpop.permute.xlu0 %884
      %v887 = vsel %vm871, %v883, 0
      %vm889 = vcmask 1043456
      %v891 = vsel %vm889, %v885, 0
      %893 = vmatprep.subr.bf16.mxu0 0
      %894 = vmatpush1.bf16.msra.mxu0 0
      %895 = vmatprep.subr.bf16.mxu0 0
      %896 = vmatpush1.bf16.msra.mxu0 0
      %897 = vmatprep.subr.bf16.mxu0 0
      %898 = vmatpush1.bf16.msra.mxu0 0
      %899 = vmatprep.subr.bf16.mxu0 0
      %900 = vmatpush1.bf16.msra.mxu0 0
      %901 = vmatprep.subr.bf16.mxu0 0
      %902 = vmatpush1.bf16.msra.mxu0 0
      %903 = vmatprep.subr.bf16.mxu0 0
      %904 = vmatpush1.bf16.msra.mxu0 0
      %905 = vmatprep.subr.bf16.mxu0 0
      %906 = vmatpush1.bf16.msra.mxu0 0
      %907 = vmatprep.subr.bf16.mxu0 0
      %908 = vmatpush1.bf16.msra.mxu0 %v891
      %909 = vmatprep.subr.bf16.mxu0 0
      %910 = vmatpush2.bf16.msra.mxu0 0
      %911 = vmatprep.subr.bf16.mxu0 0
      %912 = vmatpush2.bf16.msra.mxu0 0
      %913 = vmatprep.subr.bf16.mxu0 0
      %914 = vmatpush2.bf16.msra.mxu0 0
      %915 = vmatprep.subr.bf16.mxu0 0
      %916 = vmatpush2.bf16.msra.mxu0 0
      %917 = vmatprep.subr.bf16.mxu0 0
      %918 = vmatpush2.bf16.msra.mxu0 0
      %919 = vmatprep.subr.bf16.mxu0 0
      %920 = vmatpush2.bf16.msra.mxu0 0
      %921 = vmatprep.subr.bf16.mxu0 0
      %922 = vmatpush2.bf16.msra.mxu0 0
      %923 = vmatprep.subr.bf16.mxu0 0
      %924 = vmatpush2.bf16.msra.mxu0 0
      %925 = vmatprep.mubr.bf16.mxu0 0
      %926 = vmatmul.mubr.bf16.gmra.mxu0 %v887
      %v927 = vpop.f32.mrf.mxu0
      %v928 = vadd.f32 0.0, %v927
      %v929 = vpop.f32.mrf.mxu0
      %v930 = vpop.f32.mrf.mxu0
      %v931 = vpop.f32.mrf.mxu0
      %932 = vdwg.mxu0
      %933 = vrot.lane.b32.xlu0 %v812, 112
      %v934 = vpop.permute.xlu0 %933
      %935 = vrot.lane.b32.xlu0 %v812, 80
      %v936 = vpop.permute.xlu0 %935
      %v938 = vsel %vm816, %v934, 0
      %v941 = vsel %vm816, %v936, 0
      %943 = vmatprep.subr.bf16.mxu0 0
      %944 = vmatpush1.bf16.xpose.msra.mxu0 0
      %945 = vmatprep.subr.bf16.mxu0 0
      %946 = vmatpush1.bf16.xpose.msra.mxu0 0
      %947 = vmatprep.subr.bf16.mxu0 0
      %948 = vmatpush1.bf16.xpose.msra.mxu0 0
      %949 = vmatprep.subr.bf16.mxu0 0
      %950 = vmatpush1.bf16.xpose.msra.mxu0 0
      %951 = vmatprep.subr.bf16.mxu0 0
      %952 = vmatpush1.bf16.xpose.msra.mxu0 0
      %953 = vmatprep.subr.bf16.mxu0 0
      %954 = vmatpush1.bf16.xpose.msra.mxu0 0
      %955 = vmatprep.subr.bf16.mxu0 0
      %956 = vmatpush1.bf16.xpose.msra.mxu0 0
      %957 = vmatprep.subr.bf16.mxu0 0
      %958 = vmatpush1.bf16.xpose.msra.mxu0 %v941
      %959 = vmatprep.subr.bf16.mxu0 0
      %960 = vmatpush2.bf16.xpose.msra.mxu0 0
      %961 = vmatprep.subr.bf16.mxu0 0
      %962 = vmatpush2.bf16.xpose.msra.mxu0 0
      %963 = vmatprep.subr.bf16.mxu0 0
      %964 = vmatpush2.bf16.xpose.msra.mxu0 0
      %965 = vmatprep.subr.bf16.mxu0 0
      %966 = vmatpush2.bf16.xpose.msra.mxu0 0
      %967 = vmatprep.subr.bf16.mxu0 0
      %968 = vmatpush2.bf16.xpose.msra.mxu0 0
      %969 = vmatprep.subr.bf16.mxu0 0
      %970 = vmatpush2.bf16.xpose.msra.mxu0 0
      %971 = vmatprep.subr.bf16.mxu0 0
      %972 = vmatpush2.bf16.xpose.msra.mxu0 0
      %973 = vmatprep.subr.bf16.mxu0 0
      %974 = vmatpush2.bf16.xpose.msra.mxu0 0
      %975 = vmatprep.mubr.bf16.mxu0 0
      %976 = vmatmul.mubr.bf16.gmra.mxu0 %v938
      %v977 = vpop.f32.mrf.mxu0
      %v978 = vadd.f32 0.0, %v977
      %v979 = vpop.f32.mrf.mxu0
      %v980 = vpop.f32.mrf.mxu0
      %v981 = vpop.f32.mrf.mxu0
      %982 = vdwg.mxu0
      %v983 = vmul.f32 %v978, 0.25
      %v984 = vadd.f32 %v983, %v868
      %v985 = vsel %vm871, %v984, -inf
      %986 = vmax.xlane.f32.xlu0 %v985
      %v987 = vpop.xlane.xlu0 %986
      %v988 = vsub.f32 %v984, %v987
      %v989 = vmul.f32 %v988, 1.442695
      %v990 = vpow.pop %v989
      %v991 = vsel %vm871, %v990, 0.0
      %992 = vadd.xlane.f32.xlu0 %v991
      %v993 = vpop.xlane.xlu0 %992
      %v994 = vrcp.pop %v993
      %v995 = vmul.f32 %v990, %v994
      %v996 = vpack.c.bf16 %v995, %v995
      %997 = vrot.lane.b32.xlu0 %v812, 48
      %v998 = vpop.permute.xlu0 %997
      %v1000 = vsel %vm871, %v996, 0
      %v1003 = vsel %vm889, %v998, 0
      %1005 = vmatprep.subr.bf16.mxu0 0
      %1006 = vmatpush1.bf16.msra.mxu0 0
      %1007 = vmatprep.subr.bf16.mxu0 0
      %1008 = vmatpush1.bf16.msra.mxu0 0
      %1009 = vmatprep.subr.bf16.mxu0 0
      %1010 = vmatpush1.bf16.msra.mxu0 0
      %1011 = vmatprep.subr.bf16.mxu0 0
      %1012 = vmatpush1.bf16.msra.mxu0 0
      %1013 = vmatprep.subr.bf16.mxu0 0
      %1014 = vmatpush1.bf16.msra.mxu0 0
      %1015 = vmatprep.subr.bf16.mxu0 0
      %1016 = vmatpush1.bf16.msra.mxu0 0
      %1017 = vmatprep.subr.bf16.mxu0 0
      %1018 = vmatpush1.bf16.msra.mxu0 0
      %1019 = vmatprep.subr.bf16.mxu0 0
      %1020 = vmatpush1.bf16.msra.mxu0 %v1003
      %1021 = vmatprep.subr.bf16.mxu0 0
      %1022 = vmatpush2.bf16.msra.mxu0 0
      %1023 = vmatprep.subr.bf16.mxu0 0
      %1024 = vmatpush2.bf16.msra.mxu0 0
      %1025 = vmatprep.subr.bf16.mxu0 0
      %1026 = vmatpush2.bf16.msra.mxu0 0
      %1027 = vmatprep.subr.bf16.mxu0 0
      %1028 = vmatpush2.bf16.msra.mxu0 0
      %1029 = vmatprep.subr.bf16.mxu0 0
      %1030 = vmatpush2.bf16.msra.mxu0 0
      %1031 = vmatprep.subr.bf16.mxu0 0
      %1032 = vmatpush2.bf16.msra.mxu0 0
      %1033 = vmatprep.subr.bf16.mxu0 0
      %1034 = vmatpush2.bf16.msra.mxu0 0
      %1035 = vmatprep.subr.bf16.mxu0 0
      %1036 = vmatpush2.bf16.msra.mxu0 0
      %1037 = vmatprep.mubr.bf16.mxu0 0
      %1038 = vmatmul.mubr.bf16.gmra.mxu0 %v1000
      %v1039 = vpop.f32.mrf.mxu0
      %v1040 = vadd.f32 0.0, %v1039
      %v1041 = vpop.f32.mrf.mxu0
      %v1042 = vpop.f32.mrf.mxu0
      %v1043 = vpop.f32.mrf.mxu0
      %1044 = vdwg.mxu0
      %1046 = vrot.lane.b32.xlu0 %v1040, 16
      %v1047 = vpop.permute.xlu0 %1046
      %v1049 = vsel %vm816, %v928, %v1047
      %v1050 = vpack.c.bf16 %v1049, %v1049
      %v1052 = vlaneseq
      %v1053 = vshrl.u32 %v1052, 7
      %v1054 = vsub.s32 0, %v1053
      %v1055 = vrot.slane %v732, %v1054
      %v1061 = vunpack.c.l.b16 %v728
      %v1062 = vunpack.c.l.b16 %v729
      %v1063 = vunpack.c.l.b16 %v730
      %v1064 = vunpack.c.l.b16 %v731
      %v1065 = vpack.c.b16 %v1062, %v1061
      %v1066 = vpack.c.b16 %v1064, %v1063
      %v1070 = vsel %vm768, %v1050, 0
      %1072 = vmatprep.subr.bf16.mxu0 0
      %1073 = vmatpush1.bf16.msra.mxu0 0
      %1074 = vmatprep.subr.bf16.mxu0 0
      %1075 = vmatpush1.bf16.msra.mxu0 0
      %1076 = vmatprep.subr.bf16.mxu0 0
      %1077 = vmatpush1.bf16.msra.mxu0 0
      %1078 = vmatprep.subr.bf16.mxu0 0
      %1079 = vmatpush1.bf16.msra.mxu0 0
      %1080 = vmatprep.subr.bf16.mxu0 0
      %1081 = vmatpush1.bf16.msra.mxu0 0
      %1082 = vmatprep.subr.bf16.mxu0 0
      %1083 = vmatpush1.bf16.msra.mxu0 0
      %1084 = vmatprep.subr.bf16.mxu0 0
      %1085 = vmatpush1.bf16.msra.mxu0 %v1066
      %1086 = vmatprep.subr.bf16.mxu0 0
      %1087 = vmatpush1.bf16.msra.mxu0 %v1065
      %1088 = vmatprep.subr.bf16.mxu0 0
      %1089 = vmatpush2.bf16.msra.mxu0 0
      %1090 = vmatprep.subr.bf16.mxu0 0
      %1091 = vmatpush2.bf16.msra.mxu0 0
      %1092 = vmatprep.subr.bf16.mxu0 0
      %1093 = vmatpush2.bf16.msra.mxu0 0
      %1094 = vmatprep.subr.bf16.mxu0 0
      %1095 = vmatpush2.bf16.msra.mxu0 0
      %1096 = vmatprep.subr.bf16.mxu0 0
      %1097 = vmatpush2.bf16.msra.mxu0 0
      %1098 = vmatprep.subr.bf16.mxu0 0
      %1099 = vmatpush2.bf16.msra.mxu0 0
      %1100 = vmatprep.subr.bf16.mxu0 0
      %1101 = vmatpush2.bf16.msra.mxu0 0
      %1102 = vmatprep.subr.bf16.mxu0 0
      %1103 = vmatpush2.bf16.msra.mxu0 0
      %1104 = vmatprep.mubr.bf16.mxu0 0
      %1105 = vmatmul.mubr.bf16.gmra.mxu0 %v1070
      %v1106 = vpop.f32.mrf.mxu0
      %v1107 = vadd.f32 %v1055, %v1106
      %v1108 = vpop.f32.mrf.mxu0
      %v1109 = vpop.f32.mrf.mxu0
      %v1110 = vpop.f32.mrf.mxu0
      %1111 = vdwg.mxu0
      %v1112 = vadd.f32 %v1107, %v719
      %v1113 = vsel %vm768, %v1112, 0.0
      %1114 = vadd.xlane.f32.xlu0 %v1113
      %v1115 = vpop.xlane.xlu0 %1114
      %v1116 = vrcp.pop 32.0
      %v1117 = vmul.f32 %v1115, %v1116
      %v1118 = vsub.f32 %v1112, %v1117
      %v1119 = vmul.f32 %v1118, %v1118
      %v1120 = vsel %vm768, %v1119, 0.0
      %1121 = vadd.xlane.f32.xlu0 %v1120
      %v1122 = vpop.xlane.xlu0 %1121
      %v1123 = vmul.f32 %v1122, %v1116
      %v1124 = vadd.f32 %v1123, 1e-12
      %v1125 = vrsqrt.pop %v1124
      %v1126 = vmul.f32 %v1118, %v1125
      %v1127 = vlaneseq
      %v1128 = vshrl.u32 %v1127, 7
      %v1129 = vsub.s32 0, %v1128
      %v1130 = vrot.slane %v733, %v1129
      %v1131 = vmul.f32 %v1126, %v1130
      %v1132 = vlaneseq
      %v1133 = vshrl.u32 %v1132, 7
      %v1134 = vsub.s32 1, %v1133
      %v1135 = vrot.slane %v733, %v1134
      %v1136 = vadd.f32 %v1131, %v1135
      %v1137 = vpack.c.bf16 %v1136, %v1136
      %v1139 = vlaneseq
      %v1140 = vshrl.u32 %v1139, 7
      %v1141 = vsub.s32 0, %v1140
      %v1142 = vrot.slane %v738, %v1141
      %v1148 = vunpack.c.l.b16 %v734
      %v1149 = vunpack.c.l.b16 %v735
      %v1150 = vunpack.c.l.b16 %v736
      %v1151 = vunpack.c.l.b16 %v737
      %v1152 = vpack.c.b16 %v1149, %v1148
      %v1153 = vpack.c.b16 %v1151, %v1150
      %v1157 = vsel %vm768, %v1137, 0
      %1159 = vmatprep.subr.bf16.mxu0 0
      %1160 = vmatpush1.bf16.msra.mxu0 0
      %1161 = vmatprep.subr.bf16.mxu0 0
      %1162 = vmatpush1.bf16.msra.mxu0 0
      %1163 = vmatprep.subr.bf16.mxu0 0
      %1164 = vmatpush1.bf16.msra.mxu0 0
      %1165 = vmatprep.subr.bf16.mxu0 0
      %1166 = vmatpush1.bf16.msra.mxu0 0
      %1167 = vmatprep.subr.bf16.mxu0 0
      %1168 = vmatpush1.bf16.msra.mxu0 0
      %1169 = vmatprep.subr.bf16.mxu0 0
      %1170 = vmatpush1.bf16.msra.mxu0 0
      %1171 = vmatprep.subr.bf16.mxu0 0
      %1172 = vmatpush1.bf16.msra.mxu0 %v1153
      %1173 = vmatprep.subr.bf16.mxu0 0
      %1174 = vmatpush1.bf16.msra.mxu0 %v1152
      %1175 = vmatprep.subr.bf16.mxu0 0
      %1176 = vmatpush2.bf16.msra.mxu0 0
      %1177 = vmatprep.subr.bf16.mxu0 0
      %1178 = vmatpush2.bf16.msra.mxu0 0
      %1179 = vmatprep.subr.bf16.mxu0 0
      %1180 = vmatpush2.bf16.msra.mxu0 0
      %1181 = vmatprep.subr.bf16.mxu0 0
      %1182 = vmatpush2.bf16.msra.mxu0 0
      %1183 = vmatprep.subr.bf16.mxu0 0
      %1184 = vmatpush2.bf16.msra.mxu0 0
      %1185 = vmatprep.subr.bf16.mxu0 0
      %1186 = vmatpush2.bf16.msra.mxu0 0
      %1187 = vmatprep.subr.bf16.mxu0 0
      %1188 = vmatpush2.bf16.msra.mxu0 0
      %1189 = vmatprep.subr.bf16.mxu0 0
      %1190 = vmatpush2.bf16.msra.mxu0 0
      %1191 = vmatprep.mubr.bf16.mxu0 0
      %1192 = vmatmul.mubr.bf16.gmra.mxu0 %v1157
      %v1193 = vpop.f32.mrf.mxu0
      %v1194 = vadd.f32 %v1142, %v1193
      %v1195 = vpop.f32.mrf.mxu0
      %v1196 = vpop.f32.mrf.mxu0
      %v1197 = vpop.f32.mrf.mxu0
      %1198 = vdwg.mxu0
      %v1199 = vmul.f32 %v1194, 0.5
      %v1200 = vmul.f32 %v1194, 0.70710677
      %v1201 = vand.u32 2147483647, %v1200
      %v1202 = vmul.f32 %v1201, 0.3275911
      %v1203 = vadd.f32 %v1202, 1.0
      %v1204 = vrcp.pop %v1203
      %v1205 = vmul.f32 1.0, %v1204
      %v1206 = vmul.f32 %v1205, 1.0614054
      %v1207 = vadd.f32 %v1206, -1.4531521
      %v1208 = vmul.f32 %v1207, %v1205
      %v1209 = vadd.f32 %v1208, 1.4214138
      %v1210 = vmul.f32 %v1209, %v1205
      %v1211 = vadd.f32 %v1210, -0.28449672
      %v1212 = vmul.f32 %v1211, %v1205
      %v1213 = vadd.f32 %v1212, 0.2548296
      %v1214 = vmul.f32 %v1213, %v1205
      %v1215 = vsub.f32 0.0, %v1201
      %v1216 = vmul.f32 %v1215, %v1201
      %v1217 = vmul.f32 %v1216, 1.442695
      %v1218 = vpow.pop %v1217
      %v1219 = vmul.f32 %v1214, %v1218
      %v1220 = vsub.f32 1.0, %v1219
      %vm1221 = vcmp.ge.f32.partialorder %v1200, 0.0
      %v1222 = vsub.f32 0.0, %v1220
      %v1223 = vsel %vm1221, %v1220, %v1222
      %v1224 = vadd.f32 %v1223, 1.0
      %v1225 = vmul.f32 %v1199, %v1224
      %v1226 = vpack.c.bf16 %v1225, %v1225
      %v1228 = vlaneseq
      %v1229 = vshrl.u32 %v1228, 7
      %v1230 = vsub.s32 0, %v1229
      %v1231 = vrot.slane %v747, %v1230
      %v1241 = vunpack.c.l.b16 %v739
      %v1242 = vunpack.c.l.b16 %v740
      %v1243 = vunpack.c.l.b16 %v741
      %v1244 = vunpack.c.l.b16 %v742
      %v1245 = vunpack.c.l.b16 %v743
      %v1246 = vunpack.c.l.b16 %v744
      %v1247 = vunpack.c.l.b16 %v745
      %v1248 = vunpack.c.l.b16 %v746
      %v1249 = vpack.c.b16 %v1242, %v1241
      %v1250 = vpack.c.b16 %v1244, %v1243
      %v1251 = vpack.c.b16 %v1246, %v1245
      %v1252 = vpack.c.b16 %v1248, %v1247
      %vm1257 = vcmask 523264
      %v1259 = vsel %vm1257, %v1226, 0
      %1261 = vmatprep.subr.bf16.mxu0 0
      %1262 = vmatpush1.bf16.msra.mxu0 0
      %1263 = vmatprep.subr.bf16.mxu0 0
      %1264 = vmatpush1.bf16.msra.mxu0 0
      %1265 = vmatprep.subr.bf16.mxu0 0
      %1266 = vmatpush1.bf16.msra.mxu0 0
      %1267 = vmatprep.subr.bf16.mxu0 0
      %1268 = vmatpush1.bf16.msra.mxu0 0
      %1269 = vmatprep.subr.bf16.mxu0 0
      %1270 = vmatpush1.bf16.msra.mxu0 %v1252
      %1271 = vmatprep.subr.bf16.mxu0 0
      %1272 = vmatpush1.bf16.msra.mxu0 %v1251
      %1273 = vmatprep.subr.bf16.mxu0 0
      %1274 = vmatpush1.bf16.msra.mxu0 %v1250
      %1275 = vmatprep.subr.bf16.mxu0 0
      %1276 = vmatpush1.bf16.msra.mxu0 %v1249
      %1277 = vmatprep.subr.bf16.mxu0 0
      %1278 = vmatpush2.bf16.msra.mxu0 0
      %1279 = vmatprep.subr.bf16.mxu0 0
      %1280 = vmatpush2.bf16.msra.mxu0 0
      %1281 = vmatprep.subr.bf16.mxu0 0
      %1282 = vmatpush2.bf16.msra.mxu0 0
      %1283 = vmatprep.subr.bf16.mxu0 0
      %1284 = vmatpush2.bf16.msra.mxu0 0
      %1285 = vmatprep.subr.bf16.mxu0 0
      %1286 = vmatpush2.bf16.msra.mxu0 0
      %1287 = vmatprep.subr.bf16.mxu0 0
      %1288 = vmatpush2.bf16.msra.mxu0 0
      %1289 = vmatprep.subr.bf16.mxu0 0
      %1290 = vmatpush2.bf16.msra.mxu0 0
      %1291 = vmatprep.subr.bf16.mxu0 0
      %1292 = vmatpush2.bf16.msra.mxu0 0
      %1293 = vmatprep.mubr.bf16.mxu0 0
      %1294 = vmatmul.mubr.bf16.gmra.mxu0 %v1259
      %v1295 = vpop.f32.mrf.mxu0
      %v1296 = vadd.f32 %v1231, %v1295
      %v1297 = vpop.f32.mrf.mxu0
      %v1298 = vpop.f32.mrf.mxu0
      %v1299 = vpop.f32.mrf.mxu0
      %1300 = vdwg.mxu0
      %v1301 = vadd.f32 %v1296, %v1136
      %v1302 = vsel %vm768, %v1301, 0.0
      %1303 = vadd.xlane.f32.xlu0 %v1302
      %v1304 = vpop.xlane.xlu0 %1303
      %v1305 = vmul.f32 %v1304, %v1116
      %v1306 = vsub.f32 %v1301, %v1305
      %v1307 = vmul.f32 %v1306, %v1306
      %v1308 = vsel %vm768, %v1307, 0.0
      %1309 = vadd.xlane.f32.xlu0 %v1308
      %v1310 = vpop.xlane.xlu0 %1309
      %v1311 = vmul.f32 %v1310, %v1116
      %v1312 = vadd.f32 %v1311, 1e-12
      %v1313 = vrsqrt.pop %v1312
      %v1314 = vmul.f32 %v1306, %v1313
      %v1315 = vlaneseq
      %v1316 = vshrl.u32 %v1315, 7
      %v1317 = vsub.s32 0, %v1316
      %v1318 = vrot.slane %v748, %v1317
      %v1319 = vmul.f32 %v1314, %v1318
      %v1320 = vlaneseq
      %v1321 = vshrl.u32 %v1320, 7
      %v1322 = vsub.s32 1, %v1321
      %v1323 = vrot.slane %v748, %v1322
      %v1324 = vadd.f32 %v1319, %v1323
      %1325 = vst.msk [vmem:[#allocation2] sm:$0xff] %vm768, %v1324
      %p1326 = scmp.eq.s32.totalorder %s33, 1
      // Predicated region
      $region85: #{forward.1} parent=79 // pred_check
        %p1327 = pneg %p1326
      $region86: #{forward.1} parent=79 // pred_check_branch
        %1329 = sbr.rel (%p1327) target = $region88
      $region87: #{forward.1} parent=79 // pred_region
        %v1330 = vld [vmem:[%s13] sm:$0x1]
        %v1331 = vmul.f32 %v1324, %v1330
        %vm1332 = vcmask 253952
        %v1333 = vsel %vm1332, %v1331, 0.0
        %1334 = vadd.xlane.f32.xlu0 %v1333
        %v1335 = vpop.xlane.xlu0 %1334
        %v1336 = vld [vmem:[#allocation3] sm:$0x1]
        %v1337 = vadd.f32 %v1335, %v1336
        %v1338 = vsub.f32 0.0, %v1337
        %v1339 = vmul.f32 %v1338, 1.442695
        %v1340 = vpow.pop %v1339
        %v1341 = vadd.f32 %v1340, 1.0
        %v1342 = vrcp.pop %v1341
        %v1343 = vmul.f32 1.0, %v1342
        %vm1344 = vcmask 0
        %1345 = vst.msk [vmem:[%s685] sm:$0x1] %vm1344, %v1343
      $region88: #{forward.1} parent=79 // pred_fallthru
        _
      %p1346 = scmp.lt.s32.totalorder %s32, 1
      %s1347 = scalar_select %p1346, %s32, 1
      %s1348 = scalar_lea.vmem %s15, %s1347
      // Predicated region
      $region89: #{forward.1} parent=79 // pred_check
        %p1349 = pneg %p433
      $region90: #{forward.1} parent=79 // pred_check_branch
        %1351 = sbr.rel (%p1349) target = $region92
      $region91: #{forward.1} parent=79 // pred_region
        _
      $region92: #{forward.1} parent=79 // pred_fallthru
        _
    $region80: #{forward.1} parent=5 // pred_fallthru
      _
    %p1352 = scmp.le.s32.totalorder 2, %s23
    // Predicated region
    $region93: #{forward.1} parent=5 // pred_check
      %p1353 = pneg %p1352
    $region94: #{forward.1} parent=5 // pred_check_branch
      %1355 = sbr.rel (%p1353) target = $region96
    $region95: #{forward.1} parent=5 // pred_region
      %s1356 = ssub.s32 %s23, 2
      // Predicated region
      $region97: #{forward.1} parent=95 // pred_check
        %p1357 = pneg %p439
      $region98: #{forward.1} parent=95 // pred_check_branch
        %1359 = sbr.rel (%p1357) target = $region100
      $region99: #{forward.1} parent=95 // pred_region
        %p1360 = scmp.lt.s32.totalorder %s34, 1
        %s1361 = scalar_select %p1360, %s34, 1
        %s1362 = scalar_lea.vmem %s15, %s1361
      $region100: #{forward.1} parent=95 // pred_fallthru
        _
    $region96: #{forward.1} parent=5 // pred_fallthru
      _
  $region6: #{forward.1} parent=0 // loop_footer
    %s27 = sadd.s32 1, %s23
  $region7: #{forward.1} parent=0 // loop_footer_branch
    %22 = sbr.rel target = $region3
  $region8: #{forward.1} parent=0 // loop_exit
    _

</llo_original>
